<compile_context>
chip_gen: v5e
topology: v5e:2x2
jax: 0.10.0
libtpu: 0.0.40
codegen_flags: <defaults>
</compile_context>

<pallas_src>
import functools
import math

import jax
import jax.numpy as jnp
from jax import lax
from jax.experimental import pallas as pl
from jax.experimental.pallas import tpu as pltpu

# ----- model hyper-parameters (small, consistent with the module) -----------
NUM_FEATURES = 8
NUM_CLASSES = 3
HIDDEN = 32
HEADS = 4
HEAD_DIM = HIDDEN // HEADS
BN_EPS = 1e-5
BIG = 1e30


# ============================================================================
# Single fused kernel
# ============================================================================
def fused_graph_transformer_kernel(
    x_ref, adjmask_ref, batch_ref,
    w1_ref, b1_ref, w2_ref, b2_ref, wh_ref, bh_ref,
    out_ref, *, heads, head_dim, hidden, num_graphs,
):
    n = x_ref.shape[0]
    inv_sqrt_d = jnp.float32(1.0 / math.sqrt(head_dim))

    # Block-diagonal (head-major) additive attention bias, expanded ONCE from
    # the int8 mask: 0 where (same head AND edge j->i), -1e30 elsewhere.
    attn_bias = (adjmask_ref[...].astype(jnp.float32) - 1.0) * jnp.float32(BIG)

    # hidden x hidden identity (built once): its 8-row blocks place each
    # head's stacked rows back into the correct lane block via tiny matmuls,
    # avoiding unaligned lane-axis concatenates / masked sub-vreg stores.
    ident = (lax.broadcasted_iota(jnp.int32, (hidden, hidden), 0) ==
             lax.broadcasted_iota(jnp.int32, (hidden, hidden), 1)
             ).astype(jnp.float32)

    def transformer_conv(x, w_ref, b_ref):
        # Fused projection; columns are per-head interleaved [q_h|k_h|v_h] x
        # heads, then the skip block (BN eval folded into V/skip host-side).
        proj = jnp.dot(x, w_ref[...], preferred_element_type=jnp.float32) + b_ref[...]
        skip = proj[:, 3 * hidden:4 * hidden]                    # [n, hidden]
        # Stack heads on the sublane axis (head-major, aligned concat):
        qkv = jnp.concatenate(
            [proj[:, h * 3 * head_dim:(h + 1) * 3 * head_dim] for h in range(heads)],
            axis=0)                                              # [heads*n, 3*hd]
        q = qkv[:, 0:head_dim]
        k = qkv[:, head_dim:2 * head_dim]
        v = qkv[:, 2 * head_dim:3 * head_dim]
        # ONE block-diagonal score matmul for all heads; contract last dims of
        # both operands -> no explicit transpose of K.
        s = lax.dot_general(q, k, dimension_numbers=(((1,), (1,)), ((), ())),
                            preferred_element_type=jnp.float32)  # [heads*n, heads*n]
        s = s * inv_sqrt_d + attn_bias
        # ONE softmax chain for all heads (rows never mix heads or graphs).
        m = jnp.max(s, axis=-1, keepdims=True)
        e = jnp.exp(s - m)                                       # masked -> exact 0
        den = jnp.sum(e, axis=-1, keepdims=True)
        # Exact division; destination nodes with no incoming edge aggregate to
        # exactly 0 (matches PyG), instead of degrading to uniform attention.
        valid = (m > jnp.float32(-1e29)).astype(jnp.float32)
        attn = e * (valid / den)
        agg_s = jnp.dot(attn, v, preferred_element_type=jnp.float32)  # [heads*n, hd]
        # Un-stack: head h rows -> lanes [h*hd, (h+1)*hd) via identity blocks.
        agg = None
        for h in range(heads):
            part = jnp.dot(agg_s[h * n:(h + 1) * n, :],
                           ident[h * head_dim:(h + 1) * head_dim, :],
                           preferred_element_type=jnp.float32)    # [n, hidden]
            agg = part if agg is None else agg + part
        # BatchNorm (eval) folded into the V/skip weights: skip-add + ReLU.
        return jnp.maximum(agg + skip, 0.0)

    h1 = transformer_conv(x_ref[...], w1_ref, b1_ref)   # conv1 + bn1 + relu
    h2 = transformer_conv(h1, w2_ref, b2_ref)           # conv2 + bn2 + relu

    # global_max_pool without a [G, N, hidden] broadcast temp: static unroll
    # over graphs, masked sublane max, rows assembled with iota selects.
    batch_col = batch_ref[...]                                    # [n, 1] int32
    g_iota = lax.broadcasted_iota(jnp.int32, (num_graphs, 1), 0)
    pooled = jnp.full((num_graphs, hidden), -BIG, dtype=jnp.float32)
    for g in range(num_graphs):
        row = jnp.max(jnp.where(batch_col == g, h2, jnp.float32(-BIG)),
                      axis=0, keepdims=True)                      # [1, hidden]
        pooled = jnp.where(g_iota == g, row, pooled)

    # Packed head params: row blocks of wh are [pool.w1 | pool.w2 |
    # classifier.lin1 (BN folded) | classifier.lin2 zero-padded to hidden
    # cols]; the padded bias columns of the last block are -1e30.
    wh = wh_ref[...]                                              # [4*hidden, hidden]
    bh = bh_ref[...]                                              # [4, hidden]

    # self.pool : Linear -> ReLU -> Linear
    t = jnp.dot(pooled, wh[0:hidden, :], preferred_element_type=jnp.float32) + bh[0:1, :]
    t = jnp.maximum(t, 0.0)
    t = jnp.dot(t, wh[hidden:2 * hidden, :], preferred_element_type=jnp.float32) + bh[1:2, :]

    # self.classifier : Linear -> BN(eval, folded) -> ReLU -> Dropout(id) -> Linear
    c = jnp.dot(t, wh[2 * hidden:3 * hidden, :], preferred_element_type=jnp.float32) + bh[2:3, :]
    c = jnp.maximum(c, 0.0)
    logits = (jnp.dot(c, wh[3 * hidden:4 * hidden, :],
                      preferred_element_type=jnp.float32) + bh[3:4, :])  # [G, hidden]

    # log_softmax over the padded lane block (padded columns sit at ~-1e30 so
    # they contribute exp(.)=0); the wrapper slices to NUM_CLASSES.
    m = jnp.max(logits, axis=-1, keepdims=True)
    z = logits - m
    lse = jnp.log(jnp.sum(jnp.exp(z), axis=-1, keepdims=True))
    out_ref[...] = z - lse


# ============================================================================
# Wrapper (glue: sparse graph -> int8 block-diag mask; single pallas_call)
# ============================================================================
@functools.partial(jax.jit, static_argnames=("num_graphs",))
def graph_transformer_classifier(x, edge_index, batch, packed, *, num_graphs):
    n = x.shape[0]
    # adjacency: adj[i, j] = 1 iff there is an edge j -> i (messages src->dst)
    adj = jnp.zeros((n, n), jnp.float32).at[edge_index[1], edge_index[0]].set(1.0)
    # Head-major block-diagonal edge mask, int8 (4x less HBM than f32); the
    # kernel expands it to the additive -1e30 bias once in VMEM.
    blk_mask = jnp.kron(jnp.eye(HEADS, dtype=jnp.float32), adj).astype(jnp.int8)
    batch_col = batch.astype(jnp.int32).reshape(n, 1)

    args = (x, blk_mask, batch_col,
            packed["w1"], packed["b1"], packed["w2"], packed["b2"],
            packed["wh"], packed["bh"])
    kern = functools.partial(fused_graph_transformer_kernel,
                             heads=HEADS, head_dim=HEAD_DIM, hidden=HIDDEN,
                             num_graphs=num_graphs)
    padded = pl.pallas_call(
        kern,
        out_shape=jax.ShapeDtypeStruct((num_graphs, HIDDEN), jnp.float32),
        in_specs=[pl.BlockSpec(memory_space=pltpu.MemorySpace.VMEM)] * len(args),
        out_specs=pl.BlockSpec(memory_space=pltpu.MemorySpace.VMEM),
    )(*args)
    return padded[:, :NUM_CLASSES]


# ============================================================================
# Deterministic parameter init (synthetic; shapes from the module __init__)
# ============================================================================
def _bn_fold(kg, kb, km, kv, dim):
    gamma = 1.0 + 0.1 * jax.random.normal(kg, (1, dim), jnp.float32)
    beta = 0.1 * jax.random.normal(kb, (1, dim), jnp.float32)
    mean = 0.05 * jax.random.normal(km, (1, dim), jnp.float32)
    var = 1.0 + 0.1 * jnp.abs(jax.random.normal(kv, (1, dim), jnp.float32))
    scale = gamma / jnp.sqrt(var + BN_EPS)
    shift = beta - mean * scale
    return scale, shift


def init_conv_bn(key, in_dim):
    ks = jax.random.split(key, 12)
    s = 1.0 / math.sqrt(in_dim)
    p = {}
    for i, name in enumerate(("q", "k", "v", "s")):
        p["w" + name] = s * jax.random.normal(ks[2 * i], (in_dim, HIDDEN), jnp.float32)
        p["b" + name] = 0.1 * jax.random.normal(ks[2 * i + 1], (1, HIDDEN), jnp.float32)
    p["bn_scale"], p["bn_shift"] = _bn_fold(ks[8], ks[9], ks[10], ks[11], HIDDEN)
    return p


def init_head(key):
    ks = jax.random.split(key, 12)
    s = 1.0 / math.sqrt(HIDDEN)
    p = {
        "w1": s * jax.random.normal(ks[0], (HIDDEN, HIDDEN), jnp.float32),
        "b1": 0.1 * jax.random.normal(ks[1], (1, HIDDEN), jnp.float32),
        "w2": s * jax.random.normal(ks[2], (HIDDEN, HIDDEN), jnp.float32),
        "b2": 0.1 * jax.random.normal(ks[3], (1, HIDDEN), jnp.float32),
        "wc1": s * jax.random.normal(ks[4], (HIDDEN, HIDDEN), jnp.float32),
        "bc1": 0.1 * jax.random.normal(ks[5], (1, HIDDEN), jnp.float32),
        "wc2": s * jax.random.normal(ks[6], (HIDDEN, NUM_CLASSES), jnp.float32),
        "bc2": 0.1 * jax.random.normal(ks[7], (1, NUM_CLASSES), jnp.float32),
    }
    p["bn_scale"], p["bn_shift"] = _bn_fold(ks[8], ks[9], ks[10], ks[11], HIDDEN)
    return p


# ---- host-side packing + eval-BN folding (done once) -----------------------
def _pack_conv(p):
    # BN(attn@V + skip) = attn@(V*scale) + x@(Ws*scale) + (bs*scale + shift):
    # fold the per-column BN affine into the V / skip columns and biases.
    # Columns are per-head interleaved [q_h | k_h | v_h] so the kernel can
    # stack heads with a single aligned sublane concat.
    scale, shift = p["bn_scale"], p["bn_shift"]
    wv, bv = p["wv"] * scale, p["bv"] * scale
    ws, bs = p["ws"] * scale, p["bs"] * scale + shift
    w_cols, b_cols = [], []
    for h in range(HEADS):
        sl = slice(h * HEAD_DIM, (h + 1) * HEAD_DIM)
        w_cols += [p["wq"][:, sl], p["wk"][:, sl], wv[:, sl]]
        b_cols += [p["bq"][:, sl], p["bk"][:, sl], bv[:, sl]]
    w_cols.append(ws)
    b_cols.append(bs)
    w = jnp.concatenate(w_cols, axis=1)   # [Fin, 4*HIDDEN]
    b = jnp.concatenate(b_cols, axis=1)   # [1,   4*HIDDEN]
    return w, b


def _pack_head(p):
    # Fold the classifier BatchNorm into its first Linear; zero-pad the final
    # [HIDDEN, NUM_CLASSES] Linear to HIDDEN columns and give the padded bias
    # columns -1e30 so the in-kernel log_softmax can run over the full block.
    scale, shift = p["bn_scale"], p["bn_shift"]
    wc1, bc1 = p["wc1"] * scale, p["bc1"] * scale + shift
    wc2 = jnp.zeros((HIDDEN, HIDDEN), jnp.float32).at[:, :NUM_CLASSES].set(p["wc2"])
    bc2 = jnp.full((1, HIDDEN), -BIG, jnp.float32).at[:, :NUM_CLASSES].set(p["bc2"])
    wh = jnp.concatenate([p["w1"], p["w2"], wc1, wc2], axis=0)   # [4*HIDDEN, HIDDEN]
    bh = jnp.concatenate([p["b1"], p["b2"], bc1, bc2], axis=0)   # [4, HIDDEN]
    return wh, bh


def pack_params(params):
    w1, b1 = _pack_conv(params["conv1"])
    w2, b2 = _pack_conv(params["conv2"])
    wh, bh = _pack_head(params["head"])
    return {"w1": w1, "b1": b1, "w2": w2, "b2": b2, "wh": wh, "bh": bh}


# ============================================================================
if __name__ == "__main__":
    key = jax.random.PRNGKey(0)
    k_x, k_c1, k_c2, k_h = jax.random.split(key, 4)

    N, G = 16, 2
    x = jax.random.normal(k_x, (N, NUM_FEATURES), jnp.float32)

    # two graphs of 8 nodes each: bidirectional ring + self loops
    src, dst = [], []
    n_g = N // G
    for g in range(G):
        base = g * n_g
        for i in range(n_g):
            a, b = base + i, base + (i + 1) % n_g
            src += [a, b, a]
            dst += [b, a, a]
    edge_index = jnp.array([src, dst], dtype=jnp.int32)      # [2, 48]
    batch = jnp.array([g for g in range(G) for _ in range(n_g)], dtype=jnp.int32)

    params = {
        "conv1": init_conv_bn(k_c1, NUM_FEATURES),
        "conv2": init_conv_bn(k_c2, HIDDEN),
        "head": init_head(k_h),
    }
    packed = pack_params(params)

    out = graph_transformer_classifier(x, edge_index, batch, packed, num_graphs=G)
    out = jax.block_until_ready(out)

    assert out.shape == (G, NUM_CLASSES)
    assert bool(jnp.all(jnp.isfinite(out)))
    # rows of log_softmax must exp-sum to 1
    assert bool(jnp.allclose(jnp.exp(out).sum(axis=1), 1.0, atol=1e-5))
    print("KERNEL_OK")
</pallas_src>

<mosaic_0001>
module attributes {stable_mosaic.version = 11 : i64} {
  func.func @fused_graph_transformer_kernel(%arg0: memref<16x8xf32, #tpu.memory_space<vmem>>, %arg1: memref<64x64xi8, #tpu.memory_space<vmem>>, %arg2: memref<16x1xi32, #tpu.memory_space<vmem>>, %arg3: memref<8x128xf32, #tpu.memory_space<vmem>>, %arg4: memref<1x128xf32, #tpu.memory_space<vmem>>, %arg5: memref<32x128xf32, #tpu.memory_space<vmem>>, %arg6: memref<1x128xf32, #tpu.memory_space<vmem>>, %arg7: memref<128x32xf32, #tpu.memory_space<vmem>>, %arg8: memref<4x32xf32, #tpu.memory_space<vmem>>, %arg9: memref<2x32xf32, #tpu.memory_space<vmem>>) attributes {dimension_semantics = [], scalar_prefetch = 0 : i64, scratch_operands = 0 : i64, tpu.core_type = #tpu.core_type<tc>} {
    %c0 = arith.constant 0 : index
    %c0_0 = arith.constant 0 : index
    %0 = vector.load %arg1[%c0, %c0_0] : memref<64x64xi8, #tpu.memory_space<vmem>>, vector<64x64xi8>
    %1 = arith.sitofp %0 : vector<64x64xi8> to vector<64x64xf32>
    %cst = arith.constant 1.000000e+00 : f32
    %2 = vector.broadcast %cst : f32 to vector<64x64xf32>
    %3 = arith.subf %1, %2 : vector<64x64xf32>
    %cst_1 = arith.constant 1.000000e+30 : f32
    %4 = vector.broadcast %cst_1 : f32 to vector<64x64xf32>
    %5 = arith.mulf %3, %4 : vector<64x64xf32>
    %6 = tpu.iota {dimensions = array<i32: 0>} : vector<32x32xi32>
    %7 = tpu.iota {dimensions = array<i32: 1>} : vector<32x32xi32>
    %8 = arith.cmpi eq, %6, %7 : vector<32x32xi32>
    %9 = arith.extui %8 : vector<32x32xi1> to vector<32x32xi32>
    %10 = arith.sitofp %9 : vector<32x32xi32> to vector<32x32xf32>
    %c0_2 = arith.constant 0 : index
    %c0_3 = arith.constant 0 : index
    %11 = vector.load %arg0[%c0_2, %c0_3] : memref<16x8xf32, #tpu.memory_space<vmem>>, vector<16x8xf32>
    %c0_4 = arith.constant 0 : index
    %c0_5 = arith.constant 0 : index
    %12 = vector.load %arg3[%c0_4, %c0_5] : memref<8x128xf32, #tpu.memory_space<vmem>>, vector<8x128xf32>
    %cst_6 = arith.constant dense<0.000000e+00> : vector<16x128xf32>
    %13 = tpu.matmul %11, %12, %cst_6 {dimension_numbers = #tpu.dot_dimension_numbers<[1], [0], [0], [1], [0, 0, 1, 1], [], []>} : vector<16x8xf32>, vector<8x128xf32>, vector<16x128xf32> -> vector<16x128xf32>
    %c0_7 = arith.constant 0 : index
    %c0_8 = arith.constant 0 : index
    %14 = vector.load %arg4[%c0_7, %c0_8] : memref<1x128xf32, #tpu.memory_space<vmem>>, vector<1x128xf32>
    %15 = vector.broadcast %14 : vector<1x128xf32> to vector<16x128xf32>
    %16 = arith.addf %13, %15 : vector<16x128xf32>
    %17 = vector.extract_strided_slice %16 {offsets = [0, 96], sizes = [16, 32], strides = [1, 1]} : vector<16x128xf32> to vector<16x32xf32>
    %18 = vector.extract_strided_slice %16 {offsets = [0, 0], sizes = [16, 24], strides = [1, 1]} : vector<16x128xf32> to vector<16x24xf32>
    %19 = vector.extract_strided_slice %16 {offsets = [0, 24], sizes = [16, 24], strides = [1, 1]} : vector<16x128xf32> to vector<16x24xf32>
    %20 = vector.extract_strided_slice %16 {offsets = [0, 48], sizes = [16, 24], strides = [1, 1]} : vector<16x128xf32> to vector<16x24xf32>
    %21 = vector.extract_strided_slice %16 {offsets = [0, 72], sizes = [16, 24], strides = [1, 1]} : vector<16x128xf32> to vector<16x24xf32>
    %22 = tpu.concatenate %18, %19, %20, %21 in 0 : vector<16x24xf32>, vector<16x24xf32>, vector<16x24xf32>, vector<16x24xf32> -> vector<64x24xf32>
    %23 = vector.extract_strided_slice %22 {offsets = [0, 0], sizes = [64, 8], strides = [1, 1]} : vector<64x24xf32> to vector<64x8xf32>
    %24 = vector.extract_strided_slice %22 {offsets = [0, 8], sizes = [64, 8], strides = [1, 1]} : vector<64x24xf32> to vector<64x8xf32>
    %25 = vector.extract_strided_slice %22 {offsets = [0, 16], sizes = [64, 8], strides = [1, 1]} : vector<64x24xf32> to vector<64x8xf32>
    %cst_9 = arith.constant dense<0.000000e+00> : vector<64x64xf32>
    %26 = tpu.matmul %23, %24, %cst_9 {dimension_numbers = #tpu.dot_dimension_numbers<[1], [1], [0], [0], [0, 0, 1, 0], [], []>} : vector<64x8xf32>, vector<64x8xf32>, vector<64x64xf32> -> vector<64x64xf32>
    %cst_10 = arith.constant 0.353553385 : f32
    %27 = vector.broadcast %cst_10 : f32 to vector<64x64xf32>
    %28 = arith.mulf %26, %27 : vector<64x64xf32>
    %29 = arith.addf %28, %5 : vector<64x64xf32>
    %cst_11 = arith.constant dense<0xFF800000> : vector<64xf32>
    %30 = vector.multi_reduction <maximumf>, %29, %cst_11 [1] : vector<64x64xf32> to vector<64xf32>
    %31 = vector.shape_cast %30 : vector<64xf32> to vector<64x1xf32>
    %32 = vector.broadcast %31 : vector<64x1xf32> to vector<64x64xf32>
    %33 = arith.subf %29, %32 : vector<64x64xf32>
    %34 = math.exp %33 : vector<64x64xf32>
    %cst_12 = arith.constant dense<0.000000e+00> : vector<64xf32>
    %35 = vector.multi_reduction <add>, %34, %cst_12 [1] : vector<64x64xf32> to vector<64xf32>
    %36 = vector.shape_cast %35 : vector<64xf32> to vector<64x1xf32>
    %cst_13 = arith.constant -1.000000e+29 : f32
    %37 = vector.broadcast %cst_13 : f32 to vector<64x1xf32>
    %38 = arith.cmpf ogt, %31, %37 : vector<64x1xf32>
    %39 = arith.extui %38 : vector<64x1xi1> to vector<64x1xi32>
    %40 = arith.sitofp %39 : vector<64x1xi32> to vector<64x1xf32>
    %41 = arith.divf %40, %36 : vector<64x1xf32>
    %42 = vector.broadcast %41 : vector<64x1xf32> to vector<64x64xf32>
    %43 = arith.mulf %34, %42 : vector<64x64xf32>
    %cst_14 = arith.constant dense<0.000000e+00> : vector<64x8xf32>
    %44 = tpu.matmul %43, %25, %cst_14 {dimension_numbers = #tpu.dot_dimension_numbers<[1], [0], [0], [1], [0, 0, 1, 1], [], []>} : vector<64x64xf32>, vector<64x8xf32>, vector<64x8xf32> -> vector<64x8xf32>
    %45 = vector.extract_strided_slice %44 {offsets = [0, 0], sizes = [16, 8], strides = [1, 1]} : vector<64x8xf32> to vector<16x8xf32>
    %46 = vector.extract_strided_slice %10 {offsets = [0, 0], sizes = [8, 32], strides = [1, 1]} : vector<32x32xf32> to vector<8x32xf32>
    %cst_15 = arith.constant dense<0.000000e+00> : vector<16x32xf32>
    %47 = tpu.matmul %45, %46, %cst_15 {dimension_numbers = #tpu.dot_dimension_numbers<[1], [0], [0], [1], [0, 0, 1, 1], [], []>} : vector<16x8xf32>, vector<8x32xf32>, vector<16x32xf32> -> vector<16x32xf32>
    %48 = vector.extract_strided_slice %44 {offsets = [16, 0], sizes = [16, 8], strides = [1, 1]} : vector<64x8xf32> to vector<16x8xf32>
    %49 = vector.extract_strided_slice %10 {offsets = [8, 0], sizes = [8, 32], strides = [1, 1]} : vector<32x32xf32> to vector<8x32xf32>
    %cst_16 = arith.constant dense<0.000000e+00> : vector<16x32xf32>
    %50 = tpu.matmul %48, %49, %cst_16 {dimension_numbers = #tpu.dot_dimension_numbers<[1], [0], [0], [1], [0, 0, 1, 1], [], []>} : vector<16x8xf32>, vector<8x32xf32>, vector<16x32xf32> -> vector<16x32xf32>
    %51 = arith.addf %47, %50 : vector<16x32xf32>
    %52 = vector.extract_strided_slice %44 {offsets = [32, 0], sizes = [16, 8], strides = [1, 1]} : vector<64x8xf32> to vector<16x8xf32>
    %53 = vector.extract_strided_slice %10 {offsets = [16, 0], sizes = [8, 32], strides = [1, 1]} : vector<32x32xf32> to vector<8x32xf32>
    %cst_17 = arith.constant dense<0.000000e+00> : vector<16x32xf32>
    %54 = tpu.matmul %52, %53, %cst_17 {dimension_numbers = #tpu.dot_dimension_numbers<[1], [0], [0], [1], [0, 0, 1, 1], [], []>} : vector<16x8xf32>, vector<8x32xf32>, vector<16x32xf32> -> vector<16x32xf32>
    %55 = arith.addf %51, %54 : vector<16x32xf32>
    %56 = vector.extract_strided_slice %44 {offsets = [48, 0], sizes = [16, 8], strides = [1, 1]} : vector<64x8xf32> to vector<16x8xf32>
    %57 = vector.extract_strided_slice %10 {offsets = [24, 0], sizes = [8, 32], strides = [1, 1]} : vector<32x32xf32> to vector<8x32xf32>
    %cst_18 = arith.constant dense<0.000000e+00> : vector<16x32xf32>
    %58 = tpu.matmul %56, %57, %cst_18 {dimension_numbers = #tpu.dot_dimension_numbers<[1], [0], [0], [1], [0, 0, 1, 1], [], []>} : vector<16x8xf32>, vector<8x32xf32>, vector<16x32xf32> -> vector<16x32xf32>
    %59 = arith.addf %55, %58 : vector<16x32xf32>
    %60 = arith.addf %59, %17 : vector<16x32xf32>
    %cst_19 = arith.constant 0.000000e+00 : f32
    %61 = vector.broadcast %cst_19 : f32 to vector<16x32xf32>
    %62 = arith.maximumf %60, %61 : vector<16x32xf32>
    %c0_20 = arith.constant 0 : index
    %c0_21 = arith.constant 0 : index
    %63 = vector.load %arg5[%c0_20, %c0_21] : memref<32x128xf32, #tpu.memory_space<vmem>>, vector<32x128xf32>
    %cst_22 = arith.constant dense<0.000000e+00> : vector<16x128xf32>
    %64 = tpu.matmul %62, %63, %cst_22 {dimension_numbers = #tpu.dot_dimension_numbers<[1], [0], [0], [1], [0, 0, 1, 1], [], []>} : vector<16x32xf32>, vector<32x128xf32>, vector<16x128xf32> -> vector<16x128xf32>
    %c0_23 = arith.constant 0 : index
    %c0_24 = arith.constant 0 : index
    %65 = vector.load %arg6[%c0_23, %c0_24] : memref<1x128xf32, #tpu.memory_space<vmem>>, vector<1x128xf32>
    %66 = vector.broadcast %65 : vector<1x128xf32> to vector<16x128xf32>
    %67 = arith.addf %64, %66 : vector<16x128xf32>
    %68 = vector.extract_strided_slice %67 {offsets = [0, 96], sizes = [16, 32], strides = [1, 1]} : vector<16x128xf32> to vector<16x32xf32>
    %69 = vector.extract_strided_slice %67 {offsets = [0, 0], sizes = [16, 24], strides = [1, 1]} : vector<16x128xf32> to vector<16x24xf32>
    %70 = vector.extract_strided_slice %67 {offsets = [0, 24], sizes = [16, 24], strides = [1, 1]} : vector<16x128xf32> to vector<16x24xf32>
    %71 = vector.extract_strided_slice %67 {offsets = [0, 48], sizes = [16, 24], strides = [1, 1]} : vector<16x128xf32> to vector<16x24xf32>
    %72 = vector.extract_strided_slice %67 {offsets = [0, 72], sizes = [16, 24], strides = [1, 1]} : vector<16x128xf32> to vector<16x24xf32>
    %73 = tpu.concatenate %69, %70, %71, %72 in 0 : vector<16x24xf32>, vector<16x24xf32>, vector<16x24xf32>, vector<16x24xf32> -> vector<64x24xf32>
    %74 = vector.extract_strided_slice %73 {offsets = [0, 0], sizes = [64, 8], strides = [1, 1]} : vector<64x24xf32> to vector<64x8xf32>
    %75 = vector.extract_strided_slice %73 {offsets = [0, 8], sizes = [64, 8], strides = [1, 1]} : vector<64x24xf32> to vector<64x8xf32>
    %76 = vector.extract_strided_slice %73 {offsets = [0, 16], sizes = [64, 8], strides = [1, 1]} : vector<64x24xf32> to vector<64x8xf32>
    %cst_25 = arith.constant dense<0.000000e+00> : vector<64x64xf32>
    %77 = tpu.matmul %74, %75, %cst_25 {dimension_numbers = #tpu.dot_dimension_numbers<[1], [1], [0], [0], [0, 0, 1, 0], [], []>} : vector<64x8xf32>, vector<64x8xf32>, vector<64x64xf32> -> vector<64x64xf32>
    %cst_26 = arith.constant 0.353553385 : f32
    %78 = vector.broadcast %cst_26 : f32 to vector<64x64xf32>
    %79 = arith.mulf %77, %78 : vector<64x64xf32>
    %80 = arith.addf %79, %5 : vector<64x64xf32>
    %cst_27 = arith.constant dense<0xFF800000> : vector<64xf32>
    %81 = vector.multi_reduction <maximumf>, %80, %cst_27 [1] : vector<64x64xf32> to vector<64xf32>
    %82 = vector.shape_cast %81 : vector<64xf32> to vector<64x1xf32>
    %83 = vector.broadcast %82 : vector<64x1xf32> to vector<64x64xf32>
    %84 = arith.subf %80, %83 : vector<64x64xf32>
    %85 = math.exp %84 : vector<64x64xf32>
    %cst_28 = arith.constant dense<0.000000e+00> : vector<64xf32>
    %86 = vector.multi_reduction <add>, %85, %cst_28 [1] : vector<64x64xf32> to vector<64xf32>
    %87 = vector.shape_cast %86 : vector<64xf32> to vector<64x1xf32>
    %cst_29 = arith.constant -1.000000e+29 : f32
    %88 = vector.broadcast %cst_29 : f32 to vector<64x1xf32>
    %89 = arith.cmpf ogt, %82, %88 : vector<64x1xf32>
    %90 = arith.extui %89 : vector<64x1xi1> to vector<64x1xi32>
    %91 = arith.sitofp %90 : vector<64x1xi32> to vector<64x1xf32>
    %92 = arith.divf %91, %87 : vector<64x1xf32>
    %93 = vector.broadcast %92 : vector<64x1xf32> to vector<64x64xf32>
    %94 = arith.mulf %85, %93 : vector<64x64xf32>
    %cst_30 = arith.constant dense<0.000000e+00> : vector<64x8xf32>
    %95 = tpu.matmul %94, %76, %cst_30 {dimension_numbers = #tpu.dot_dimension_numbers<[1], [0], [0], [1], [0, 0, 1, 1], [], []>} : vector<64x64xf32>, vector<64x8xf32>, vector<64x8xf32> -> vector<64x8xf32>
    %96 = vector.extract_strided_slice %95 {offsets = [0, 0], sizes = [16, 8], strides = [1, 1]} : vector<64x8xf32> to vector<16x8xf32>
    %97 = vector.extract_strided_slice %10 {offsets = [0, 0], sizes = [8, 32], strides = [1, 1]} : vector<32x32xf32> to vector<8x32xf32>
    %cst_31 = arith.constant dense<0.000000e+00> : vector<16x32xf32>
    %98 = tpu.matmul %96, %97, %cst_31 {dimension_numbers = #tpu.dot_dimension_numbers<[1], [0], [0], [1], [0, 0, 1, 1], [], []>} : vector<16x8xf32>, vector<8x32xf32>, vector<16x32xf32> -> vector<16x32xf32>
    %99 = vector.extract_strided_slice %95 {offsets = [16, 0], sizes = [16, 8], strides = [1, 1]} : vector<64x8xf32> to vector<16x8xf32>
    %100 = vector.extract_strided_slice %10 {offsets = [8, 0], sizes = [8, 32], strides = [1, 1]} : vector<32x32xf32> to vector<8x32xf32>
    %cst_32 = arith.constant dense<0.000000e+00> : vector<16x32xf32>
    %101 = tpu.matmul %99, %100, %cst_32 {dimension_numbers = #tpu.dot_dimension_numbers<[1], [0], [0], [1], [0, 0, 1, 1], [], []>} : vector<16x8xf32>, vector<8x32xf32>, vector<16x32xf32> -> vector<16x32xf32>
    %102 = arith.addf %98, %101 : vector<16x32xf32>
    %103 = vector.extract_strided_slice %95 {offsets = [32, 0], sizes = [16, 8], strides = [1, 1]} : vector<64x8xf32> to vector<16x8xf32>
    %104 = vector.extract_strided_slice %10 {offsets = [16, 0], sizes = [8, 32], strides = [1, 1]} : vector<32x32xf32> to vector<8x32xf32>
    %cst_33 = arith.constant dense<0.000000e+00> : vector<16x32xf32>
    %105 = tpu.matmul %103, %104, %cst_33 {dimension_numbers = #tpu.dot_dimension_numbers<[1], [0], [0], [1], [0, 0, 1, 1], [], []>} : vector<16x8xf32>, vector<8x32xf32>, vector<16x32xf32> -> vector<16x32xf32>
    %106 = arith.addf %102, %105 : vector<16x32xf32>
    %107 = vector.extract_strided_slice %95 {offsets = [48, 0], sizes = [16, 8], strides = [1, 1]} : vector<64x8xf32> to vector<16x8xf32>
    %108 = vector.extract_strided_slice %10 {offsets = [24, 0], sizes = [8, 32], strides = [1, 1]} : vector<32x32xf32> to vector<8x32xf32>
    %cst_34 = arith.constant dense<0.000000e+00> : vector<16x32xf32>
    %109 = tpu.matmul %107, %108, %cst_34 {dimension_numbers = #tpu.dot_dimension_numbers<[1], [0], [0], [1], [0, 0, 1, 1], [], []>} : vector<16x8xf32>, vector<8x32xf32>, vector<16x32xf32> -> vector<16x32xf32>
    %110 = arith.addf %106, %109 : vector<16x32xf32>
    %111 = arith.addf %110, %68 : vector<16x32xf32>
    %cst_35 = arith.constant 0.000000e+00 : f32
    %112 = vector.broadcast %cst_35 : f32 to vector<16x32xf32>
    %113 = arith.maximumf %111, %112 : vector<16x32xf32>
    %c0_36 = arith.constant 0 : index
    %c0_37 = arith.constant 0 : index
    %114 = vector.load %arg2[%c0_36, %c0_37] : memref<16x1xi32, #tpu.memory_space<vmem>>, vector<16x1xi32>
    %115 = tpu.iota {dimensions = array<i32: 0>} : vector<2x1xi32>
    %cst_38 = arith.constant -1.000000e+30 : f32
    %116 = vector.broadcast %cst_38 : f32 to vector<2x32xf32>
    %c0_i32 = arith.constant 0 : i32
    %117 = vector.broadcast %c0_i32 : i32 to vector<16x1xi32>
    %118 = arith.cmpi eq, %114, %117 : vector<16x1xi32>
    %cst_39 = arith.constant -1.000000e+30 : f32
    %119 = vector.shape_cast %118 : vector<16x1xi1> to vector<16x1xi1>
    %120 = vector.broadcast %119 : vector<16x1xi1> to vector<16x32xi1>
    %121 = vector.broadcast %cst_39 : f32 to vector<16x32xf32>
    %122 = arith.select %120, %113, %121 : vector<16x32xi1>, vector<16x32xf32>
    %cst_40 = arith.constant dense<0xFF800000> : vector<32xf32>
    %123 = vector.multi_reduction <maximumf>, %122, %cst_40 [0] : vector<16x32xf32> to vector<32xf32>
    %124 = vector.shape_cast %123 : vector<32xf32> to vector<1x32xf32>
    %c0_i32_41 = arith.constant 0 : i32
    %125 = vector.broadcast %c0_i32_41 : i32 to vector<2x1xi32>
    %126 = arith.cmpi eq, %115, %125 : vector<2x1xi32>
    %127 = vector.shape_cast %126 : vector<2x1xi1> to vector<2x1xi1>
    %128 = vector.broadcast %127 : vector<2x1xi1> to vector<2x32xi1>
    %129 = vector.shape_cast %124 : vector<1x32xf32> to vector<1x32xf32>
    %130 = vector.broadcast %129 : vector<1x32xf32> to vector<2x32xf32>
    %131 = arith.select %128, %130, %116 : vector<2x32xi1>, vector<2x32xf32>
    %c1_i32 = arith.constant 1 : i32
    %132 = vector.broadcast %c1_i32 : i32 to vector<16x1xi32>
    %133 = arith.cmpi eq, %114, %132 : vector<16x1xi32>
    %cst_42 = arith.constant -1.000000e+30 : f32
    %134 = vector.shape_cast %133 : vector<16x1xi1> to vector<16x1xi1>
    %135 = vector.broadcast %134 : vector<16x1xi1> to vector<16x32xi1>
    %136 = vector.broadcast %cst_42 : f32 to vector<16x32xf32>
    %137 = arith.select %135, %113, %136 : vector<16x32xi1>, vector<16x32xf32>
    %cst_43 = arith.constant dense<0xFF800000> : vector<32xf32>
    %138 = vector.multi_reduction <maximumf>, %137, %cst_43 [0] : vector<16x32xf32> to vector<32xf32>
    %139 = vector.shape_cast %138 : vector<32xf32> to vector<1x32xf32>
    %c1_i32_44 = arith.constant 1 : i32
    %140 = vector.broadcast %c1_i32_44 : i32 to vector<2x1xi32>
    %141 = arith.cmpi eq, %115, %140 : vector<2x1xi32>
    %142 = vector.shape_cast %141 : vector<2x1xi1> to vector<2x1xi1>
    %143 = vector.broadcast %142 : vector<2x1xi1> to vector<2x32xi1>
    %144 = vector.shape_cast %139 : vector<1x32xf32> to vector<1x32xf32>
    %145 = vector.broadcast %144 : vector<1x32xf32> to vector<2x32xf32>
    %146 = arith.select %143, %145, %131 : vector<2x32xi1>, vector<2x32xf32>
    %c0_45 = arith.constant 0 : index
    %c0_46 = arith.constant 0 : index
    %147 = vector.load %arg7[%c0_45, %c0_46] : memref<128x32xf32, #tpu.memory_space<vmem>>, vector<128x32xf32>
    %c0_47 = arith.constant 0 : index
    %c0_48 = arith.constant 0 : index
    %148 = vector.load %arg8[%c0_47, %c0_48] : memref<4x32xf32, #tpu.memory_space<vmem>>, vector<4x32xf32>
    %149 = vector.extract_strided_slice %147 {offsets = [0, 0], sizes = [32, 32], strides = [1, 1]} : vector<128x32xf32> to vector<32x32xf32>
    %cst_49 = arith.constant dense<0.000000e+00> : vector<2x32xf32>
    %150 = tpu.matmul %146, %149, %cst_49 {dimension_numbers = #tpu.dot_dimension_numbers<[1], [0], [0], [1], [0, 0, 1, 1], [], []>} : vector<2x32xf32>, vector<32x32xf32>, vector<2x32xf32> -> vector<2x32xf32>
    %151 = vector.extract_strided_slice %148 {offsets = [0, 0], sizes = [1, 32], strides = [1, 1]} : vector<4x32xf32> to vector<1x32xf32>
    %152 = vector.broadcast %151 : vector<1x32xf32> to vector<2x32xf32>
    %153 = arith.addf %150, %152 : vector<2x32xf32>
    %cst_50 = arith.constant 0.000000e+00 : f32
    %154 = vector.broadcast %cst_50 : f32 to vector<2x32xf32>
    %155 = arith.maximumf %153, %154 : vector<2x32xf32>
    %156 = vector.extract_strided_slice %147 {offsets = [32, 0], sizes = [32, 32], strides = [1, 1]} : vector<128x32xf32> to vector<32x32xf32>
    %cst_51 = arith.constant dense<0.000000e+00> : vector<2x32xf32>
    %157 = tpu.matmul %155, %156, %cst_51 {dimension_numbers = #tpu.dot_dimension_numbers<[1], [0], [0], [1], [0, 0, 1, 1], [], []>} : vector<2x32xf32>, vector<32x32xf32>, vector<2x32xf32> -> vector<2x32xf32>
    %158 = vector.extract_strided_slice %148 {offsets = [1, 0], sizes = [1, 32], strides = [1, 1]} : vector<4x32xf32> to vector<1x32xf32>
    %159 = vector.broadcast %158 : vector<1x32xf32> to vector<2x32xf32>
    %160 = arith.addf %157, %159 : vector<2x32xf32>
    %161 = vector.extract_strided_slice %147 {offsets = [64, 0], sizes = [32, 32], strides = [1, 1]} : vector<128x32xf32> to vector<32x32xf32>
    %cst_52 = arith.constant dense<0.000000e+00> : vector<2x32xf32>
    %162 = tpu.matmul %160, %161, %cst_52 {dimension_numbers = #tpu.dot_dimension_numbers<[1], [0], [0], [1], [0, 0, 1, 1], [], []>} : vector<2x32xf32>, vector<32x32xf32>, vector<2x32xf32> -> vector<2x32xf32>
    %163 = vector.extract_strided_slice %148 {offsets = [2, 0], sizes = [1, 32], strides = [1, 1]} : vector<4x32xf32> to vector<1x32xf32>
    %164 = vector.broadcast %163 : vector<1x32xf32> to vector<2x32xf32>
    %165 = arith.addf %162, %164 : vector<2x32xf32>
    %cst_53 = arith.constant 0.000000e+00 : f32
    %166 = vector.broadcast %cst_53 : f32 to vector<2x32xf32>
    %167 = arith.maximumf %165, %166 : vector<2x32xf32>
    %168 = vector.extract_strided_slice %147 {offsets = [96, 0], sizes = [32, 32], strides = [1, 1]} : vector<128x32xf32> to vector<32x32xf32>
    %cst_54 = arith.constant dense<0.000000e+00> : vector<2x32xf32>
    %169 = tpu.matmul %167, %168, %cst_54 {dimension_numbers = #tpu.dot_dimension_numbers<[1], [0], [0], [1], [0, 0, 1, 1], [], []>} : vector<2x32xf32>, vector<32x32xf32>, vector<2x32xf32> -> vector<2x32xf32>
    %170 = vector.extract_strided_slice %148 {offsets = [3, 0], sizes = [1, 32], strides = [1, 1]} : vector<4x32xf32> to vector<1x32xf32>
    %171 = vector.broadcast %170 : vector<1x32xf32> to vector<2x32xf32>
    %172 = arith.addf %169, %171 : vector<2x32xf32>
    %cst_55 = arith.constant dense<0xFF800000> : vector<2xf32>
    %173 = vector.multi_reduction <maximumf>, %172, %cst_55 [1] : vector<2x32xf32> to vector<2xf32>
    %174 = vector.shape_cast %173 : vector<2xf32> to vector<2x1xf32>
    %175 = vector.broadcast %174 : vector<2x1xf32> to vector<2x32xf32>
    %176 = arith.subf %172, %175 : vector<2x32xf32>
    %177 = math.exp %176 : vector<2x32xf32>
    %cst_56 = arith.constant dense<0.000000e+00> : vector<2xf32>
    %178 = vector.multi_reduction <add>, %177, %cst_56 [1] : vector<2x32xf32> to vector<2xf32>
    %179 = vector.shape_cast %178 : vector<2xf32> to vector<2x1xf32>
    %180 = math.log %179 : vector<2x1xf32>
    %181 = vector.broadcast %180 : vector<2x1xf32> to vector<2x32xf32>
    %182 = arith.subf %176, %181 : vector<2x32xf32>
    %c0_57 = arith.constant 0 : index
    %c0_58 = arith.constant 0 : index
    %183 = vector.load %arg9[%c0_57, %c0_58] : memref<2x32xf32, #tpu.memory_space<vmem>>, vector<2x32xf32>
    tpu.vector_store %arg9[%c0_57, %c0_58], %182 {strides = array<i32>} : memref<2x32xf32, #tpu.memory_space<vmem>>, vector<2x32xf32>,
    return
  }
}

</mosaic_0001>

<llo_original>
// kernel: graph_transformer_classifier.1
$region0: #{graph_transformer_classifier.1}
  #allocation0 [shape = 'u32[]', space=smem, size = 0x4, offset = 0x4, fixed_abs, tag = 'smem constant byte address 0x4 - core index']
  #allocation1 [shape = 'u32[72,128]{1,0:T(1,128)}', space=vmem, size = 0x9000, scoped, tag = 'internal scratch']
  %s0 = inlined_call_operand.vmem [shape: f32[16,8], index: 0, kind: input, shape index: {}]
  %s1 = inlined_call_operand.vmem [shape: s8[64,64], index: 1, kind: input, shape index: {}]
  %s2 = inlined_call_operand.vmem [shape: s32[16,1], index: 2, kind: input, shape index: {}]
  %s3 = inlined_call_operand.vmem [shape: f32[8,128], index: 3, kind: input, shape index: {}]
  %s4 = inlined_call_operand.vmem [shape: f32[1,128], index: 4, kind: input, shape index: {}]
  %s5 = inlined_call_operand.vmem [shape: f32[32,128], index: 5, kind: input, shape index: {}]
  %s6 = inlined_call_operand.vmem [shape: f32[1,128], index: 6, kind: input, shape index: {}]
  %s7 = inlined_call_operand.vmem [shape: f32[128,32], index: 7, kind: input, shape index: {}]
  %s8 = inlined_call_operand.vmem [shape: f32[4,32], index: 8, kind: input, shape index: {}]
  %s9 = inlined_call_operand.hbm [shape: f32[2,32], index: 9, kind: output, shape index: {}]
  %s10 = sld [smem:[#allocation0]]
  $region46: #{graph_transformer_classifier.1} parent=0
    _
  %s12 = ssub.s32 1, %s10
  %s13 = scalar_select 0, %s12, %s10
  $region1: #{graph_transformer_classifier.1} parent=0
    #allocation2 [shape = 'u8[1024]{0}', space=vmem, size = 0x400, scoped, tag = 'output window, operand 0, single buffered']
    #allocation3 [shape = 's32[1]{0}', space=sflag, size = 0x4, scoped, tag = 'scoped memory for graph_transformer_classifier.1']
    %14 = vsyncpa [#allocation3], 0
    // Predicated region
    $region2: #{graph_transformer_classifier.1} parent=1 // pred_check
      _
    $region3: #{graph_transformer_classifier.1} parent=1 // pred_check_branch
      %16 = sbr.rel (0) target = $region5
    $region4: #{graph_transformer_classifier.1} parent=1 // pred_region
      _
    $region5: #{graph_transformer_classifier.1} parent=1 // pred_fallthru
      _
    // Predicated region
    $region6: #{graph_transformer_classifier.1} parent=1 // pred_check
      _
    $region7: #{graph_transformer_classifier.1} parent=1 // pred_check_branch
      %18 = sbr.rel (0) target = $region9
    $region8: #{graph_transformer_classifier.1} parent=1 // pred_region
      _
    $region9: #{graph_transformer_classifier.1} parent=1 // pred_fallthru
      _
    // Predicated region
    $region10: #{graph_transformer_classifier.1} parent=1 // pred_check
      _
    $region11: #{graph_transformer_classifier.1} parent=1 // pred_check_branch
      %20 = sbr.rel (0) target = $region13
    $region12: #{graph_transformer_classifier.1} parent=1 // pred_region
      _
    $region13: #{graph_transformer_classifier.1} parent=1 // pred_fallthru
      _
    // Predicated region
    $region14: #{graph_transformer_classifier.1} parent=1 // pred_check
      _
    $region15: #{graph_transformer_classifier.1} parent=1 // pred_check_branch
      %22 = sbr.rel (0) target = $region17
    $region16: #{graph_transformer_classifier.1} parent=1 // pred_region
      _
    $region17: #{graph_transformer_classifier.1} parent=1 // pred_fallthru
      _
    // Predicated region
    $region18: #{graph_transformer_classifier.1} parent=1 // pred_check
      _
    $region19: #{graph_transformer_classifier.1} parent=1 // pred_check_branch
      %24 = sbr.rel (0) target = $region21
    $region20: #{graph_transformer_classifier.1} parent=1 // pred_region
      _
    $region21: #{graph_transformer_classifier.1} parent=1 // pred_fallthru
      _
    // Predicated region
    $region22: #{graph_transformer_classifier.1} parent=1 // pred_check
      _
    $region23: #{graph_transformer_classifier.1} parent=1 // pred_check_branch
      %26 = sbr.rel (0) target = $region25
    $region24: #{graph_transformer_classifier.1} parent=1 // pred_region
      _
    $region25: #{graph_transformer_classifier.1} parent=1 // pred_fallthru
      _
    // Predicated region
    $region26: #{graph_transformer_classifier.1} parent=1 // pred_check
      _
    $region27: #{graph_transformer_classifier.1} parent=1 // pred_check_branch
      %28 = sbr.rel (0) target = $region29
    $region28: #{graph_transformer_classifier.1} parent=1 // pred_region
      _
    $region29: #{graph_transformer_classifier.1} parent=1 // pred_fallthru
      _
    // Predicated region
    $region30: #{graph_transformer_classifier.1} parent=1 // pred_check
      _
    $region31: #{graph_transformer_classifier.1} parent=1 // pred_check_branch
      %30 = sbr.rel (0) target = $region33
    $region32: #{graph_transformer_classifier.1} parent=1 // pred_region
      _
    $region33: #{graph_transformer_classifier.1} parent=1 // pred_fallthru
      _
    // Predicated region
    $region34: #{graph_transformer_classifier.1} parent=1 // pred_check
      _
    $region35: #{graph_transformer_classifier.1} parent=1 // pred_check_branch
      %32 = sbr.rel (0) target = $region37
    $region36: #{graph_transformer_classifier.1} parent=1 // pred_region
      _
    $region37: #{graph_transformer_classifier.1} parent=1 // pred_fallthru
      _
    %v33 = vld [vmem:[%s1] sm:$0xff]
    %v34 = vld [vmem:[%s1 + $0x8] sm:$0xff]
    %v35 = vunpack.c.0.s8 %v33
    %v36 = vunpack.c.1.s8 %v33
    %v37 = vunpack.c.2.s8 %v33
    %v38 = vunpack.c.3.s8 %v33
    %v39 = vunpack.c.0.s8 %v34
    %v40 = vunpack.c.1.s8 %v34
    %v41 = vunpack.c.2.s8 %v34
    %v42 = vunpack.c.3.s8 %v34
    %v43 = vcvt.s32.f32 %v35
    %v44 = vcvt.s32.f32 %v36
    %v45 = vcvt.s32.f32 %v37
    %v46 = vcvt.s32.f32 %v38
    %v47 = vcvt.s32.f32 %v39
    %v48 = vcvt.s32.f32 %v40
    %v49 = vcvt.s32.f32 %v41
    %v50 = vcvt.s32.f32 %v42
    %v51 = vsub.f32 %v43, 1.0
    %v52 = vsub.f32 %v44, 1.0
    %v53 = vsub.f32 %v45, 1.0
    %v54 = vsub.f32 %v46, 1.0
    %v55 = vsub.f32 %v47, 1.0
    %v56 = vsub.f32 %v48, 1.0
    %v57 = vsub.f32 %v49, 1.0
    %v58 = vsub.f32 %v50, 1.0
    %v59 = vmul.f32 %v51, 1e+30
    %v60 = vmul.f32 %v52, 1e+30
    %v61 = vmul.f32 %v53, 1e+30
    %v62 = vmul.f32 %v54, 1e+30
    %v63 = vmul.f32 %v55, 1e+30
    %v64 = vmul.f32 %v56, 1e+30
    %v65 = vmul.f32 %v57, 1e+30
    %v66 = vmul.f32 %v58, 1e+30
    %v67 = vlaneseq
    %v68 = vshrl.u32 %v67, 7
    %v69 = vadd.s32 %v68, 8
    %v70 = vadd.s32 %v68, 16
    %v71 = vadd.s32 %v68, 24
    %v72 = vlaneseq
    %v73 = vand.u32 %v72, 127
    %vm74 = vcmp.eq.s32.totalorder %v68, %v73
    %vm75 = vcmp.eq.s32.totalorder %v69, %v73
    %vm76 = vcmp.eq.s32.totalorder %v70, %v73
    %vm77 = vcmp.eq.s32.totalorder %v71, %v73
    %v78 = vsel %vm74, 1, 0
    %v79 = vsel %vm75, 1, 0
    %v80 = vsel %vm76, 1, 0
    %v81 = vsel %vm77, 1, 0
    %v82 = vcvt.s32.f32 %v78
    %v83 = vcvt.s32.f32 %v79
    %v84 = vcvt.s32.f32 %v80
    %v85 = vcvt.s32.f32 %v81
    %v86 = vld [vmem:[%s0] sm:$0xff]
    %v87 = vld [vmem:[%s0 + $0x8] sm:$0xff]
    %v88 = vld [vmem:[%s3] sm:$0xff]
    %v89 = vld [vmem:[%s4] sm:$0x1]
    %v91 = vperm.slane %v89, 0
    %vm93 = vcmask 64512
    %v95 = vsel %vm93, %v86, 0
    %v98 = vsel %vm93, %v87, 0
    %100 = vmatpush.msra.mxu0 0.0
    %101 = vmatpush.msra.mxu0 0.0
    %102 = vmatpush.msra.mxu0 0.0
    %103 = vmatpush.msra.mxu0 0.0
    %104 = vmatpush.msra.mxu0 0.0
    %105 = vmatpush.msra.mxu0 0.0
    %106 = vmatpush.msra.mxu0 0.0
    %107 = vmatpush.msra.mxu0 0.0
    %108 = vmatpush.msra.mxu0 0.0
    %109 = vmatpush.msra.mxu0 0.0
    %110 = vmatpush.msra.mxu0 0.0
    %111 = vmatpush.msra.mxu0 0.0
    %112 = vmatpush.msra.mxu0 0.0
    %113 = vmatpush.msra.mxu0 0.0
    %114 = vmatpush.msra.mxu0 0.0
    %115 = vmatpush.msra.mxu0 %v88
    %116 = vmatmul.f32.gmra.mxu0 %v95
    %v117 = vpop.f32.mrf.mxu0
    %v118 = vadd.f32 %v91, %v117
    %119 = vmatmul.f32.gmra.mxu0 %v98
    %v120 = vpop.f32.mrf.mxu0
    %v121 = vadd.f32 %v91, %v120
    %122 = vdwg.mxu0
    %125 = vrot.lane.b32.xlu0 %v118, 104
    %v126 = vpop.permute.xlu0 %125
    %127 = vrot.lane.b32.xlu0 %v121, 104
    %v128 = vpop.permute.xlu0 %127
    %129 = vrot.lane.b32.xlu0 %v118, 80
    %v130 = vpop.permute.xlu0 %129
    %131 = vrot.lane.b32.xlu0 %v121, 80
    %v132 = vpop.permute.xlu0 %131
    %133 = vrot.lane.b32.xlu0 %v118, 56
    %v134 = vpop.permute.xlu0 %133
    %135 = vrot.lane.b32.xlu0 %v121, 56
    %v136 = vpop.permute.xlu0 %135
    %137 = vrot.lane.b32.xlu0 %v118, 120
    %v138 = vpop.permute.xlu0 %137
    %139 = vrot.lane.b32.xlu0 %v121, 120
    %v140 = vpop.permute.xlu0 %139
    %141 = vrot.lane.b32.xlu0 %v126, 120
    %v142 = vpop.permute.xlu0 %141
    %143 = vrot.lane.b32.xlu0 %v128, 120
    %v144 = vpop.permute.xlu0 %143
    %145 = vrot.lane.b32.xlu0 %v130, 120
    %v146 = vpop.permute.xlu0 %145
    %147 = vrot.lane.b32.xlu0 %v132, 120
    %v148 = vpop.permute.xlu0 %147
    %149 = vrot.lane.b32.xlu0 %v134, 120
    %v150 = vpop.permute.xlu0 %149
    %151 = vrot.lane.b32.xlu0 %v136, 120
    %v152 = vpop.permute.xlu0 %151
    %v153 = vsel %vm93, %v118, 0
    %v155 = vsel %vm93, %v121, 0
    %v157 = vsel %vm93, %v126, 0
    %v159 = vsel %vm93, %v128, 0
    %v161 = vsel %vm93, %v130, 0
    %v163 = vsel %vm93, %v132, 0
    %v165 = vsel %vm93, %v134, 0
    %v167 = vsel %vm93, %v136, 0
    %v169 = vsel %vm93, %v138, 0
    %v171 = vsel %vm93, %v140, 0
    %v173 = vsel %vm93, %v142, 0
    %v175 = vsel %vm93, %v144, 0
    %v177 = vsel %vm93, %v146, 0
    %v179 = vsel %vm93, %v148, 0
    %v181 = vsel %vm93, %v150, 0
    %v183 = vsel %vm93, %v152, 0
    %185 = vmatpush.xpose.msra.mxu0 0.0
    %186 = vmatpush.xpose.msra.mxu0 0.0
    %187 = vmatpush.xpose.msra.mxu0 0.0
    %188 = vmatpush.xpose.msra.mxu0 0.0
    %189 = vmatpush.xpose.msra.mxu0 0.0
    %190 = vmatpush.xpose.msra.mxu0 0.0
    %191 = vmatpush.xpose.msra.mxu0 0.0
    %192 = vmatpush.xpose.msra.mxu0 0.0
    %193 = vmatpush.xpose.msra.mxu0 %v183
    %194 = vmatpush.xpose.msra.mxu0 %v181
    %195 = vmatpush.xpose.msra.mxu0 %v179
    %196 = vmatpush.xpose.msra.mxu0 %v177
    %197 = vmatpush.xpose.msra.mxu0 %v175
    %198 = vmatpush.xpose.msra.mxu0 %v173
    %199 = vmatpush.xpose.msra.mxu0 %v171
    %200 = vmatpush.xpose.msra.mxu0 %v169
    %201 = vmatmul.f32.gmra.mxu0 %v153
    %v202 = vpop.f32.mrf.mxu0
    %v203 = vadd.f32 0.0, %v202
    %204 = vmatmul.f32.gmra.mxu0 %v155
    %v205 = vpop.f32.mrf.mxu0
    %v206 = vadd.f32 0.0, %v205
    %207 = vmatmul.f32.gmra.mxu0 %v157
    %v208 = vpop.f32.mrf.mxu0
    %v209 = vadd.f32 0.0, %v208
    %210 = vmatmul.f32.gmra.mxu0 %v159
    %v211 = vpop.f32.mrf.mxu0
    %v212 = vadd.f32 0.0, %v211
    %213 = vmatmul.f32.gmra.mxu0 %v161
    %v214 = vpop.f32.mrf.mxu0
    %v215 = vadd.f32 0.0, %v214
    %216 = vmatmul.f32.gmra.mxu0 %v163
    %v217 = vpop.f32.mrf.mxu0
    %v218 = vadd.f32 0.0, %v217
    %219 = vmatmul.f32.gmra.mxu0 %v165
    %v220 = vpop.f32.mrf.mxu0
    %v221 = vadd.f32 0.0, %v220
    %222 = vmatmul.f32.gmra.mxu0 %v167
    %v223 = vpop.f32.mrf.mxu0
    %v224 = vadd.f32 0.0, %v223
    %225 = vdwg.mxu0
    %v226 = vmul.f32 %v203, 0.35355338
    %v227 = vmul.f32 %v206, 0.35355338
    %v228 = vmul.f32 %v209, 0.35355338
    %v229 = vmul.f32 %v212, 0.35355338
    %v230 = vmul.f32 %v215, 0.35355338
    %v231 = vmul.f32 %v218, 0.35355338
    %v232 = vmul.f32 %v221, 0.35355338
    %v233 = vmul.f32 %v224, 0.35355338
    %v234 = vadd.f32 %v226, %v59
    %v235 = vadd.f32 %v227, %v60
    %v236 = vadd.f32 %v228, %v61
    %v237 = vadd.f32 %v229, %v62
    %v238 = vadd.f32 %v230, %v63
    %v239 = vadd.f32 %v231, %v64
    %v240 = vadd.f32 %v232, %v65
    %v241 = vadd.f32 %v233, %v66
    %vm242 = vcmask 523264
    %v243 = vsel %vm242, %v234, -inf
    %244 = vmax.xlane.f32.xlu0 %v243
    %v245 = vpop.xlane.xlu0 %244
    %v246 = vsel %vm242, %v235, -inf
    %247 = vmax.xlane.f32.xlu0 %v246
    %v248 = vpop.xlane.xlu0 %247
    %v249 = vsel %vm242, %v236, -inf
    %250 = vmax.xlane.f32.xlu0 %v249
    %v251 = vpop.xlane.xlu0 %250
    %v252 = vsel %vm242, %v237, -inf
    %253 = vmax.xlane.f32.xlu0 %v252
    %v254 = vpop.xlane.xlu0 %253
    %v255 = vsel %vm242, %v238, -inf
    %256 = vmax.xlane.f32.xlu0 %v255
    %v257 = vpop.xlane.xlu0 %256
    %v258 = vsel %vm242, %v239, -inf
    %259 = vmax.xlane.f32.xlu0 %v258
    %v260 = vpop.xlane.xlu0 %259
    %v261 = vsel %vm242, %v240, -inf
    %262 = vmax.xlane.f32.xlu0 %v261
    %v263 = vpop.xlane.xlu0 %262
    %v264 = vsel %vm242, %v241, -inf
    %265 = vmax.xlane.f32.xlu0 %v264
    %v266 = vpop.xlane.xlu0 %265
    %v267 = vsub.f32 %v234, %v245
    %v268 = vsub.f32 %v235, %v248
    %v269 = vsub.f32 %v236, %v251
    %v270 = vsub.f32 %v237, %v254
    %v271 = vsub.f32 %v238, %v257
    %v272 = vsub.f32 %v239, %v260
    %v273 = vsub.f32 %v240, %v263
    %v274 = vsub.f32 %v241, %v266
    %v275 = vmul.f32 %v267, 1.442695
    %v276 = vpow.pop %v275
    %v277 = vmul.f32 %v268, 1.442695
    %v278 = vpow.pop %v277
    %v279 = vmul.f32 %v269, 1.442695
    %v280 = vpow.pop %v279
    %v281 = vmul.f32 %v270, 1.442695
    %v282 = vpow.pop %v281
    %v283 = vmul.f32 %v271, 1.442695
    %v284 = vpow.pop %v283
    %v285 = vmul.f32 %v272, 1.442695
    %v286 = vpow.pop %v285
    %v287 = vmul.f32 %v273, 1.442695
    %v288 = vpow.pop %v287
    %v289 = vmul.f32 %v274, 1.442695
    %v290 = vpow.pop %v289
    %v291 = vsel %vm242, %v276, 0.0
    %292 = vadd.xlane.f32.xlu0 %v291
    %v293 = vpop.xlane.xlu0 %292
    %v294 = vsel %vm242, %v278, 0.0
    %295 = vadd.xlane.f32.xlu0 %v294
    %v296 = vpop.xlane.xlu0 %295
    %v297 = vsel %vm242, %v280, 0.0
    %298 = vadd.xlane.f32.xlu0 %v297
    %v299 = vpop.xlane.xlu0 %298
    %v300 = vsel %vm242, %v282, 0.0
    %301 = vadd.xlane.f32.xlu0 %v300
    %v302 = vpop.xlane.xlu0 %301
    %v303 = vsel %vm242, %v284, 0.0
    %304 = vadd.xlane.f32.xlu0 %v303
    %v305 = vpop.xlane.xlu0 %304
    %v306 = vsel %vm242, %v286, 0.0
    %307 = vadd.xlane.f32.xlu0 %v306
    %v308 = vpop.xlane.xlu0 %307
    %v309 = vsel %vm242, %v288, 0.0
    %310 = vadd.xlane.f32.xlu0 %v309
    %v311 = vpop.xlane.xlu0 %310
    %v312 = vsel %vm242, %v290, 0.0
    %313 = vadd.xlane.f32.xlu0 %v312
    %v314 = vpop.xlane.xlu0 %313
    %vm315 = vcmp.gt.f32.partialorder %v245, -1e+29
    %vm316 = vcmp.gt.f32.partialorder %v248, -1e+29
    %vm317 = vcmp.gt.f32.partialorder %v251, -1e+29
    %vm318 = vcmp.gt.f32.partialorder %v254, -1e+29
    %vm319 = vcmp.gt.f32.partialorder %v257, -1e+29
    %vm320 = vcmp.gt.f32.partialorder %v260, -1e+29
    %vm321 = vcmp.gt.f32.partialorder %v263, -1e+29
    %vm322 = vcmp.gt.f32.partialorder %v266, -1e+29
    %v323 = vsel %vm315, 1, 0
    %v324 = vsel %vm316, 1, 0
    %v325 = vsel %vm317, 1, 0
    %v326 = vsel %vm318, 1, 0
    %v327 = vsel %vm319, 1, 0
    %v328 = vsel %vm320, 1, 0
    %v329 = vsel %vm321, 1, 0
    %v330 = vsel %vm322, 1, 0
    %v331 = vcvt.s32.f32 %v323
    %v332 = vcvt.s32.f32 %v324
    %v333 = vcvt.s32.f32 %v325
    %v334 = vcvt.s32.f32 %v326
    %v335 = vcvt.s32.f32 %v327
    %v336 = vcvt.s32.f32 %v328
    %v337 = vcvt.s32.f32 %v329
    %v338 = vcvt.s32.f32 %v330
    %v339 = vrcp.pop %v293
    %v340 = vmul.f32 %v293, %v339
    %v341 = vsub.f32 1.0, %v340
    %v342 = vmul.f32 %v339, %v341
    %v343 = vadd.f32 %v339, %v342
    %vm344 = vweird.f32 %v293
    %vm345 = vweird.f32 %v339
    %vm346 = vmor %vm344, %vm345
    %v347 = vsel %vm346, %v339, %v343
    %v348 = vand.u32 2147483647, %v293
    %vm349 = vcmp.eq.f32.partialorder %v348, 8.507059e+37
    %v350 = vand.u32 %v293, 2147483648
    %v351 = vor.u32 1.1754944e-38, %v350
    %v352 = vsel %vm349, %v351, %v347
    %v353 = vmul.f32 %v331, %v352
    %v354 = vrcp.pop %v296
    %v355 = vmul.f32 %v296, %v354
    %v356 = vsub.f32 1.0, %v355
    %v357 = vmul.f32 %v354, %v356
    %v358 = vadd.f32 %v354, %v357
    %vm359 = vweird.f32 %v296
    %vm360 = vweird.f32 %v354
    %vm361 = vmor %vm359, %vm360
    %v362 = vsel %vm361, %v354, %v358
    %v363 = vand.u32 2147483647, %v296
    %vm364 = vcmp.eq.f32.partialorder %v363, 8.507059e+37
    %v365 = vand.u32 %v296, 2147483648
    %v366 = vor.u32 1.1754944e-38, %v365
    %v367 = vsel %vm364, %v366, %v362
    %v368 = vmul.f32 %v332, %v367
    %v369 = vrcp.pop %v299
    %v370 = vmul.f32 %v299, %v369
    %v371 = vsub.f32 1.0, %v370
    %v372 = vmul.f32 %v369, %v371
    %v373 = vadd.f32 %v369, %v372
    %vm374 = vweird.f32 %v299
    %vm375 = vweird.f32 %v369
    %vm376 = vmor %vm374, %vm375
    %v377 = vsel %vm376, %v369, %v373
    %v378 = vand.u32 2147483647, %v299
    %vm379 = vcmp.eq.f32.partialorder %v378, 8.507059e+37
    %v380 = vand.u32 %v299, 2147483648
    %v381 = vor.u32 1.1754944e-38, %v380
    %v382 = vsel %vm379, %v381, %v377
    %v383 = vmul.f32 %v333, %v382
    %v384 = vrcp.pop %v302
    %v385 = vmul.f32 %v302, %v384
    %v386 = vsub.f32 1.0, %v385
    %v387 = vmul.f32 %v384, %v386
    %v388 = vadd.f32 %v384, %v387
    %vm389 = vweird.f32 %v302
    %vm390 = vweird.f32 %v384
    %vm391 = vmor %vm389, %vm390
    %v392 = vsel %vm391, %v384, %v388
    %v393 = vand.u32 2147483647, %v302
    %vm394 = vcmp.eq.f32.partialorder %v393, 8.507059e+37
    %v395 = vand.u32 %v302, 2147483648
    %v396 = vor.u32 1.1754944e-38, %v395
    %v397 = vsel %vm394, %v396, %v392
    %v398 = vmul.f32 %v334, %v397
    %v399 = vrcp.pop %v305
    %v400 = vmul.f32 %v305, %v399
    %v401 = vsub.f32 1.0, %v400
    %v402 = vmul.f32 %v399, %v401
    %v403 = vadd.f32 %v399, %v402
    %vm404 = vweird.f32 %v305
    %vm405 = vweird.f32 %v399
    %vm406 = vmor %vm404, %vm405
    %v407 = vsel %vm406, %v399, %v403
    %v408 = vand.u32 2147483647, %v305
    %vm409 = vcmp.eq.f32.partialorder %v408, 8.507059e+37
    %v410 = vand.u32 %v305, 2147483648
    %v411 = vor.u32 1.1754944e-38, %v410
    %v412 = vsel %vm409, %v411, %v407
    %v413 = vmul.f32 %v335, %v412
    %v414 = vrcp.pop %v308
    %v415 = vmul.f32 %v308, %v414
    %v416 = vsub.f32 1.0, %v415
    %v417 = vmul.f32 %v414, %v416
    %v418 = vadd.f32 %v414, %v417
    %vm419 = vweird.f32 %v308
    %vm420 = vweird.f32 %v414
    %vm421 = vmor %vm419, %vm420
    %v422 = vsel %vm421, %v414, %v418
    %v423 = vand.u32 2147483647, %v308
    %vm424 = vcmp.eq.f32.partialorder %v423, 8.507059e+37
    %v425 = vand.u32 %v308, 2147483648
    %v426 = vor.u32 1.1754944e-38, %v425
    %v427 = vsel %vm424, %v426, %v422
    %v428 = vmul.f32 %v336, %v427
    %v429 = vrcp.pop %v311
    %v430 = vmul.f32 %v311, %v429
    %v431 = vsub.f32 1.0, %v430
    %v432 = vmul.f32 %v429, %v431
    %v433 = vadd.f32 %v429, %v432
    %vm434 = vweird.f32 %v311
    %vm435 = vweird.f32 %v429
    %vm436 = vmor %vm434, %vm435
    %v437 = vsel %vm436, %v429, %v433
    %v438 = vand.u32 2147483647, %v311
    %vm439 = vcmp.eq.f32.partialorder %v438, 8.507059e+37
    %v440 = vand.u32 %v311, 2147483648
    %v441 = vor.u32 1.1754944e-38, %v440
    %v442 = vsel %vm439, %v441, %v437
    %v443 = vmul.f32 %v337, %v442
    %v444 = vrcp.pop %v314
    %v445 = vmul.f32 %v314, %v444
    %v446 = vsub.f32 1.0, %v445
    %v447 = vmul.f32 %v444, %v446
    %v448 = vadd.f32 %v444, %v447
    %vm449 = vweird.f32 %v314
    %vm450 = vweird.f32 %v444
    %vm451 = vmor %vm449, %vm450
    %v452 = vsel %vm451, %v444, %v448
    %v453 = vand.u32 2147483647, %v314
    %vm454 = vcmp.eq.f32.partialorder %v453, 8.507059e+37
    %v455 = vand.u32 %v314, 2147483648
    %v456 = vor.u32 1.1754944e-38, %v455
    %v457 = vsel %vm454, %v456, %v452
    %v458 = vmul.f32 %v338, %v457
    %v459 = vmul.f32 %v276, %v353
    %v460 = vmul.f32 %v278, %v368
    %v461 = vmul.f32 %v280, %v383
    %v462 = vmul.f32 %v282, %v398
    %v463 = vmul.f32 %v284, %v413
    %v464 = vmul.f32 %v286, %v428
    %v465 = vmul.f32 %v288, %v443
    %v466 = vmul.f32 %v290, %v458
    %467 = vrot.lane.b32.xlu0 %v118, 112
    %v468 = vpop.permute.xlu0 %467
    %469 = vrot.lane.b32.xlu0 %v121, 112
    %v470 = vpop.permute.xlu0 %469
    %471 = vrot.lane.b32.xlu0 %v126, 112
    %v472 = vpop.permute.xlu0 %471
    %473 = vrot.lane.b32.xlu0 %v128, 112
    %v474 = vpop.permute.xlu0 %473
    %475 = vrot.lane.b32.xlu0 %v130, 112
    %v476 = vpop.permute.xlu0 %475
    %477 = vrot.lane.b32.xlu0 %v132, 112
    %v478 = vpop.permute.xlu0 %477
    %479 = vrot.lane.b32.xlu0 %v134, 112
    %v480 = vpop.permute.xlu0 %479
    %481 = vrot.lane.b32.xlu0 %v136, 112
    %v482 = vpop.permute.xlu0 %481
    %v492 = vsel %vm242, %v459, 0
    %v495 = vsel %vm242, %v460, 0
    %v498 = vsel %vm242, %v461, 0
    %v501 = vsel %vm242, %v462, 0
    %v504 = vsel %vm242, %v463, 0
    %v507 = vsel %vm242, %v464, 0
    %v510 = vsel %vm242, %v465, 0
    %v513 = vsel %vm242, %v466, 0
    %515 = vmatpush.msra.mxu0 0.0
    %516 = vmatpush.msra.mxu0 0.0
    %517 = vmatpush.msra.mxu0 0.0
    %518 = vmatpush.msra.mxu0 0.0
    %519 = vmatpush.msra.mxu0 0.0
    %520 = vmatpush.msra.mxu0 0.0
    %521 = vmatpush.msra.mxu0 0.0
    %522 = vmatpush.msra.mxu0 0.0
    %523 = vmatpush.msra.mxu0 %v482
    %524 = vmatpush.msra.mxu0 %v480
    %525 = vmatpush.msra.mxu0 %v478
    %526 = vmatpush.msra.mxu0 %v476
    %527 = vmatpush.msra.mxu0 %v474
    %528 = vmatpush.msra.mxu0 %v472
    %529 = vmatpush.msra.mxu0 %v470
    %530 = vmatpush.msra.mxu0 %v468
    %531 = vmatmul.f32.gmra.mxu0 %v492
    %v532 = vpop.f32.mrf.mxu0
    %v533 = vadd.f32 0.0, %v532
    %534 = vmatmul.f32.gmra.mxu0 %v495
    %v535 = vpop.f32.mrf.mxu0
    %v536 = vadd.f32 0.0, %v535
    %537 = vmatmul.f32.gmra.mxu0 %v498
    %v538 = vpop.f32.mrf.mxu0
    %v539 = vadd.f32 0.0, %v538
    %540 = vmatmul.f32.gmra.mxu0 %v501
    %v541 = vpop.f32.mrf.mxu0
    %v542 = vadd.f32 0.0, %v541
    %543 = vmatmul.f32.gmra.mxu0 %v504
    %v544 = vpop.f32.mrf.mxu0
    %v545 = vadd.f32 0.0, %v544
    %546 = vmatmul.f32.gmra.mxu0 %v507
    %v547 = vpop.f32.mrf.mxu0
    %v548 = vadd.f32 0.0, %v547
    %549 = vmatmul.f32.gmra.mxu0 %v510
    %v550 = vpop.f32.mrf.mxu0
    %v551 = vadd.f32 0.0, %v550
    %552 = vmatmul.f32.gmra.mxu0 %v513
    %v553 = vpop.f32.mrf.mxu0
    %v554 = vadd.f32 0.0, %v553
    %555 = vdwg.mxu0
    %v557 = vsel %vm93, %v539, 0
    %v560 = vsel %vm93, %v542, 0
    %562 = vmatpush.msra.mxu0 0.0
    %563 = vmatpush.msra.mxu0 0.0
    %564 = vmatpush.msra.mxu0 0.0
    %565 = vmatpush.msra.mxu0 0.0
    %566 = vmatpush.msra.mxu0 0.0
    %567 = vmatpush.msra.mxu0 0.0
    %568 = vmatpush.msra.mxu0 0.0
    %569 = vmatpush.msra.mxu0 0.0
    %570 = vmatpush.msra.mxu0 0.0
    %571 = vmatpush.msra.mxu0 0.0
    %572 = vmatpush.msra.mxu0 0.0
    %573 = vmatpush.msra.mxu0 0.0
    %574 = vmatpush.msra.mxu0 0.0
    %575 = vmatpush.msra.mxu0 0.0
    %576 = vmatpush.msra.mxu0 0.0
    %577 = vmatpush.msra.mxu0 %v83
    %578 = vmatmul.f32.gmra.mxu0 %v557
    %v579 = vpop.f32.mrf.mxu0
    %v580 = vadd.f32 0.0, %v579
    %581 = vmatmul.f32.gmra.mxu0 %v560
    %v582 = vpop.f32.mrf.mxu0
    %v583 = vadd.f32 0.0, %v582
    %584 = vdwg.mxu0
    %v586 = vsel %vm93, %v533, 0
    %v589 = vsel %vm93, %v536, 0
    %591 = vmatpush.msra.mxu0 0.0
    %592 = vmatpush.msra.mxu0 0.0
    %593 = vmatpush.msra.mxu0 0.0
    %594 = vmatpush.msra.mxu0 0.0
    %595 = vmatpush.msra.mxu0 0.0
    %596 = vmatpush.msra.mxu0 0.0
    %597 = vmatpush.msra.mxu0 0.0
    %598 = vmatpush.msra.mxu0 0.0
    %599 = vmatpush.msra.mxu0 0.0
    %600 = vmatpush.msra.mxu0 0.0
    %601 = vmatpush.msra.mxu0 0.0
    %602 = vmatpush.msra.mxu0 0.0
    %603 = vmatpush.msra.mxu0 0.0
    %604 = vmatpush.msra.mxu0 0.0
    %605 = vmatpush.msra.mxu0 0.0
    %606 = vmatpush.msra.mxu0 %v82
    %607 = vmatmul.f32.gmra.mxu0 %v586
    %v608 = vpop.f32.mrf.mxu0
    %v609 = vadd.f32 %v580, %v608
    %610 = vmatmul.f32.gmra.mxu0 %v589
    %v611 = vpop.f32.mrf.mxu0
    %v612 = vadd.f32 %v583, %v611
    %613 = vdwg.mxu0
    %v615 = vsel %vm93, %v545, 0
    %v618 = vsel %vm93, %v548, 0
    %620 = vmatpush.msra.mxu0 0.0
    %621 = vmatpush.msra.mxu0 0.0
    %622 = vmatpush.msra.mxu0 0.0
    %623 = vmatpush.msra.mxu0 0.0
    %624 = vmatpush.msra.mxu0 0.0
    %625 = vmatpush.msra.mxu0 0.0
    %626 = vmatpush.msra.mxu0 0.0
    %627 = vmatpush.msra.mxu0 0.0
    %628 = vmatpush.msra.mxu0 0.0
    %629 = vmatpush.msra.mxu0 0.0
    %630 = vmatpush.msra.mxu0 0.0
    %631 = vmatpush.msra.mxu0 0.0
    %632 = vmatpush.msra.mxu0 0.0
    %633 = vmatpush.msra.mxu0 0.0
    %634 = vmatpush.msra.mxu0 0.0
    %635 = vmatpush.msra.mxu0 %v84
    %636 = vmatmul.f32.gmra.mxu0 %v615
    %v637 = vpop.f32.mrf.mxu0
    %v638 = vadd.f32 0.0, %v637
    %639 = vmatmul.f32.gmra.mxu0 %v618
    %v640 = vpop.f32.mrf.mxu0
    %v641 = vadd.f32 0.0, %v640
    %642 = vdwg.mxu0
    %v643 = vadd.f32 %v609, %v638
    %v644 = vadd.f32 %v612, %v641
    %v646 = vsel %vm93, %v551, 0
    %v649 = vsel %vm93, %v554, 0
    %651 = vmatpush.msra.mxu0 0.0
    %652 = vmatpush.msra.mxu0 0.0
    %653 = vmatpush.msra.mxu0 0.0
    %654 = vmatpush.msra.mxu0 0.0
    %655 = vmatpush.msra.mxu0 0.0
    %656 = vmatpush.msra.mxu0 0.0
    %657 = vmatpush.msra.mxu0 0.0
    %658 = vmatpush.msra.mxu0 0.0
    %659 = vmatpush.msra.mxu0 0.0
    %660 = vmatpush.msra.mxu0 0.0
    %661 = vmatpush.msra.mxu0 0.0
    %662 = vmatpush.msra.mxu0 0.0
    %663 = vmatpush.msra.mxu0 0.0
    %664 = vmatpush.msra.mxu0 0.0
    %665 = vmatpush.msra.mxu0 0.0
    %666 = vmatpush.msra.mxu0 %v85
    %667 = vmatmul.f32.gmra.mxu0 %v646
    %v668 = vpop.f32.mrf.mxu0
    %v669 = vadd.f32 0.0, %v668
    %670 = vmatmul.f32.gmra.mxu0 %v649
    %v671 = vpop.f32.mrf.mxu0
    %v672 = vadd.f32 0.0, %v671
    %673 = vdwg.mxu0
    %v674 = vadd.f32 %v643, %v669
    %v675 = vadd.f32 %v644, %v672
    %676 = vrot.lane.b32.xlu0 %v118, 32
    %v677 = vpop.permute.xlu0 %676
    %678 = vrot.lane.b32.xlu0 %v121, 32
    %v679 = vpop.permute.xlu0 %678
    %v682 = vadd.f32 %v674, %v677
    %v683 = vadd.f32 %v675, %v679
    %v684 = vmax.f32 %v682, 0.0
    %v685 = vmax.f32 %v683, 0.0
    %v686 = vld [vmem:[%s5] sm:$0xff]
    %v687 = vld [vmem:[%s5 + $0x8] sm:$0xff]
    %v688 = vld [vmem:[%s5 + $0x10] sm:$0xff]
    %v689 = vld [vmem:[%s5 + $0x18] sm:$0xff]
    %v690 = vld [vmem:[%s6] sm:$0x1]
    %v692 = vperm.slane %v690, 0
    %vm694 = vcmask 261120
    %v696 = vsel %vm694, %v684, 0
    %v699 = vsel %vm694, %v685, 0
    %701 = vmatpush.msra.mxu0 0.0
    %702 = vmatpush.msra.mxu0 0.0
    %703 = vmatpush.msra.mxu0 0.0
    %704 = vmatpush.msra.mxu0 0.0
    %705 = vmatpush.msra.mxu0 0.0
    %706 = vmatpush.msra.mxu0 0.0
    %707 = vmatpush.msra.mxu0 0.0
    %708 = vmatpush.msra.mxu0 0.0
    %709 = vmatpush.msra.mxu0 0.0
    %710 = vmatpush.msra.mxu0 0.0
    %711 = vmatpush.msra.mxu0 0.0
    %712 = vmatpush.msra.mxu0 0.0
    %713 = vmatpush.msra.mxu0 %v689
    %714 = vmatpush.msra.mxu0 %v688
    %715 = vmatpush.msra.mxu0 %v687
    %716 = vmatpush.msra.mxu0 %v686
    %717 = vmatmul.f32.gmra.mxu0 %v696
    %v718 = vpop.f32.mrf.mxu0
    %v719 = vadd.f32 %v692, %v718
    %720 = vmatmul.f32.gmra.mxu0 %v699
    %v721 = vpop.f32.mrf.mxu0
    %v722 = vadd.f32 %v692, %v721
    %723 = vdwg.mxu0
    %726 = vrot.lane.b32.xlu0 %v719, 104
    %v727 = vpop.permute.xlu0 %726
    %728 = vrot.lane.b32.xlu0 %v722, 104
    %v729 = vpop.permute.xlu0 %728
    %730 = vrot.lane.b32.xlu0 %v719, 80
    %v731 = vpop.permute.xlu0 %730
    %732 = vrot.lane.b32.xlu0 %v722, 80
    %v733 = vpop.permute.xlu0 %732
    %734 = vrot.lane.b32.xlu0 %v719, 56
    %v735 = vpop.permute.xlu0 %734
    %736 = vrot.lane.b32.xlu0 %v722, 56
    %v737 = vpop.permute.xlu0 %736
    %738 = vrot.lane.b32.xlu0 %v719, 120
    %v739 = vpop.permute.xlu0 %738
    %740 = vrot.lane.b32.xlu0 %v722, 120
    %v741 = vpop.permute.xlu0 %740
    %742 = vrot.lane.b32.xlu0 %v727, 120
    %v743 = vpop.permute.xlu0 %742
    %744 = vrot.lane.b32.xlu0 %v729, 120
    %v745 = vpop.permute.xlu0 %744
    %746 = vrot.lane.b32.xlu0 %v731, 120
    %v747 = vpop.permute.xlu0 %746
    %748 = vrot.lane.b32.xlu0 %v733, 120
    %v749 = vpop.permute.xlu0 %748
    %750 = vrot.lane.b32.xlu0 %v735, 120
    %v751 = vpop.permute.xlu0 %750
    %752 = vrot.lane.b32.xlu0 %v737, 120
    %v753 = vpop.permute.xlu0 %752
    %v754 = vsel %vm93, %v719, 0
    %v756 = vsel %vm93, %v722, 0
    %v758 = vsel %vm93, %v727, 0
    %v760 = vsel %vm93, %v729, 0
    %v762 = vsel %vm93, %v731, 0
    %v764 = vsel %vm93, %v733, 0
    %v766 = vsel %vm93, %v735, 0
    %v768 = vsel %vm93, %v737, 0
    %v770 = vsel %vm93, %v739, 0
    %v772 = vsel %vm93, %v741, 0
    %v774 = vsel %vm93, %v743, 0
    %v776 = vsel %vm93, %v745, 0
    %v778 = vsel %vm93, %v747, 0
    %v780 = vsel %vm93, %v749, 0
    %v782 = vsel %vm93, %v751, 0
    %v784 = vsel %vm93, %v753, 0
    %786 = vmatpush.xpose.msra.mxu0 0.0
    %787 = vmatpush.xpose.msra.mxu0 0.0
    %788 = vmatpush.xpose.msra.mxu0 0.0
    %789 = vmatpush.xpose.msra.mxu0 0.0
    %790 = vmatpush.xpose.msra.mxu0 0.0
    %791 = vmatpush.xpose.msra.mxu0 0.0
    %792 = vmatpush.xpose.msra.mxu0 0.0
    %793 = vmatpush.xpose.msra.mxu0 0.0
    %794 = vmatpush.xpose.msra.mxu0 %v784
    %795 = vmatpush.xpose.msra.mxu0 %v782
    %796 = vmatpush.xpose.msra.mxu0 %v780
    %797 = vmatpush.xpose.msra.mxu0 %v778
    %798 = vmatpush.xpose.msra.mxu0 %v776
    %799 = vmatpush.xpose.msra.mxu0 %v774
    %800 = vmatpush.xpose.msra.mxu0 %v772
    %801 = vmatpush.xpose.msra.mxu0 %v770
    %802 = vmatmul.f32.gmra.mxu0 %v754
    %v803 = vpop.f32.mrf.mxu0
    %v804 = vadd.f32 0.0, %v803
    %805 = vmatmul.f32.gmra.mxu0 %v756
    %v806 = vpop.f32.mrf.mxu0
    %v807 = vadd.f32 0.0, %v806
    %808 = vmatmul.f32.gmra.mxu0 %v758
    %v809 = vpop.f32.mrf.mxu0
    %v810 = vadd.f32 0.0, %v809
    %811 = vmatmul.f32.gmra.mxu0 %v760
    %v812 = vpop.f32.mrf.mxu0
    %v813 = vadd.f32 0.0, %v812
    %814 = vmatmul.f32.gmra.mxu0 %v762
    %v815 = vpop.f32.mrf.mxu0
    %v816 = vadd.f32 0.0, %v815
    %817 = vmatmul.f32.gmra.mxu0 %v764
    %v818 = vpop.f32.mrf.mxu0
    %v819 = vadd.f32 0.0, %v818
    %820 = vmatmul.f32.gmra.mxu0 %v766
    %v821 = vpop.f32.mrf.mxu0
    %v822 = vadd.f32 0.0, %v821
    %823 = vmatmul.f32.gmra.mxu0 %v768
    %v824 = vpop.f32.mrf.mxu0
    %v825 = vadd.f32 0.0, %v824
    %826 = vdwg.mxu0
    %v827 = vmul.f32 %v804, 0.35355338
    %v828 = vmul.f32 %v807, 0.35355338
    %v829 = vmul.f32 %v810, 0.35355338
    %v830 = vmul.f32 %v813, 0.35355338
    %v831 = vmul.f32 %v816, 0.35355338
    %v832 = vmul.f32 %v819, 0.35355338
    %v833 = vmul.f32 %v822, 0.35355338
    %v834 = vmul.f32 %v825, 0.35355338
    %v835 = vadd.f32 %v827, %v59
    %v836 = vadd.f32 %v828, %v60
    %v837 = vadd.f32 %v829, %v61
    %v838 = vadd.f32 %v830, %v62
    %v839 = vadd.f32 %v831, %v63
    %v840 = vadd.f32 %v832, %v64
    %v841 = vadd.f32 %v833, %v65
    %v842 = vadd.f32 %v834, %v66
    %v843 = vsel %vm242, %v835, -inf
    %844 = vmax.xlane.f32.xlu0 %v843
    %v845 = vpop.xlane.xlu0 %844
    %v846 = vsel %vm242, %v836, -inf
    %847 = vmax.xlane.f32.xlu0 %v846
    %v848 = vpop.xlane.xlu0 %847
    %v849 = vsel %vm242, %v837, -inf
    %850 = vmax.xlane.f32.xlu0 %v849
    %v851 = vpop.xlane.xlu0 %850
    %v852 = vsel %vm242, %v838, -inf
    %853 = vmax.xlane.f32.xlu0 %v852
    %v854 = vpop.xlane.xlu0 %853
    %v855 = vsel %vm242, %v839, -inf
    %856 = vmax.xlane.f32.xlu0 %v855
    %v857 = vpop.xlane.xlu0 %856
    %v858 = vsel %vm242, %v840, -inf
    %859 = vmax.xlane.f32.xlu0 %v858
    %v860 = vpop.xlane.xlu0 %859
    %v861 = vsel %vm242, %v841, -inf
    %862 = vmax.xlane.f32.xlu0 %v861
    %v863 = vpop.xlane.xlu0 %862
    %v864 = vsel %vm242, %v842, -inf
    %865 = vmax.xlane.f32.xlu0 %v864
    %v866 = vpop.xlane.xlu0 %865
    %v867 = vsub.f32 %v835, %v845
    %v868 = vsub.f32 %v836, %v848
    %v869 = vsub.f32 %v837, %v851
    %v870 = vsub.f32 %v838, %v854
    %v871 = vsub.f32 %v839, %v857
    %v872 = vsub.f32 %v840, %v860
    %v873 = vsub.f32 %v841, %v863
    %v874 = vsub.f32 %v842, %v866
    %v875 = vmul.f32 %v867, 1.442695
    %v876 = vpow.pop %v875
    %v877 = vmul.f32 %v868, 1.442695
    %v878 = vpow.pop %v877
    %v879 = vmul.f32 %v869, 1.442695
    %v880 = vpow.pop %v879
    %v881 = vmul.f32 %v870, 1.442695
    %v882 = vpow.pop %v881
    %v883 = vmul.f32 %v871, 1.442695
    %v884 = vpow.pop %v883
    %v885 = vmul.f32 %v872, 1.442695
    %v886 = vpow.pop %v885
    %v887 = vmul.f32 %v873, 1.442695
    %v888 = vpow.pop %v887
    %v889 = vmul.f32 %v874, 1.442695
    %v890 = vpow.pop %v889
    %v891 = vsel %vm242, %v876, 0.0
    %892 = vadd.xlane.f32.xlu0 %v891
    %v893 = vpop.xlane.xlu0 %892
    %v894 = vsel %vm242, %v878, 0.0
    %895 = vadd.xlane.f32.xlu0 %v894
    %v896 = vpop.xlane.xlu0 %895
    %v897 = vsel %vm242, %v880, 0.0
    %898 = vadd.xlane.f32.xlu0 %v897
    %v899 = vpop.xlane.xlu0 %898
    %v900 = vsel %vm242, %v882, 0.0
    %901 = vadd.xlane.f32.xlu0 %v900
    %v902 = vpop.xlane.xlu0 %901
    %v903 = vsel %vm242, %v884, 0.0
    %904 = vadd.xlane.f32.xlu0 %v903
    %v905 = vpop.xlane.xlu0 %904
    %v906 = vsel %vm242, %v886, 0.0
    %907 = vadd.xlane.f32.xlu0 %v906
    %v908 = vpop.xlane.xlu0 %907
    %v909 = vsel %vm242, %v888, 0.0
    %910 = vadd.xlane.f32.xlu0 %v909
    %v911 = vpop.xlane.xlu0 %910
    %v912 = vsel %vm242, %v890, 0.0
    %913 = vadd.xlane.f32.xlu0 %v912
    %v914 = vpop.xlane.xlu0 %913
    %vm915 = vcmp.gt.f32.partialorder %v845, -1e+29
    %vm916 = vcmp.gt.f32.partialorder %v848, -1e+29
    %vm917 = vcmp.gt.f32.partialorder %v851, -1e+29
    %vm918 = vcmp.gt.f32.partialorder %v854, -1e+29
    %vm919 = vcmp.gt.f32.partialorder %v857, -1e+29
    %vm920 = vcmp.gt.f32.partialorder %v860, -1e+29
    %vm921 = vcmp.gt.f32.partialorder %v863, -1e+29
    %vm922 = vcmp.gt.f32.partialorder %v866, -1e+29
    %v923 = vsel %vm915, 1, 0
    %v924 = vsel %vm916, 1, 0
    %v925 = vsel %vm917, 1, 0
    %v926 = vsel %vm918, 1, 0
    %v927 = vsel %vm919, 1, 0
    %v928 = vsel %vm920, 1, 0
    %v929 = vsel %vm921, 1, 0
    %v930 = vsel %vm922, 1, 0
    %v931 = vcvt.s32.f32 %v923
    %v932 = vcvt.s32.f32 %v924
    %v933 = vcvt.s32.f32 %v925
    %v934 = vcvt.s32.f32 %v926
    %v935 = vcvt.s32.f32 %v927
    %v936 = vcvt.s32.f32 %v928
    %v937 = vcvt.s32.f32 %v929
    %v938 = vcvt.s32.f32 %v930
    %v939 = vrcp.pop %v893
    %v940 = vmul.f32 %v893, %v939
    %v941 = vsub.f32 1.0, %v940
    %v942 = vmul.f32 %v939, %v941
    %v943 = vadd.f32 %v939, %v942
    %vm944 = vweird.f32 %v893
    %vm945 = vweird.f32 %v939
    %vm946 = vmor %vm944, %vm945
    %v947 = vsel %vm946, %v939, %v943
    %v948 = vand.u32 2147483647, %v893
    %vm949 = vcmp.eq.f32.partialorder %v948, 8.507059e+37
    %v950 = vand.u32 %v893, 2147483648
    %v951 = vor.u32 1.1754944e-38, %v950
    %v952 = vsel %vm949, %v951, %v947
    %v953 = vmul.f32 %v931, %v952
    %v954 = vrcp.pop %v896
    %v955 = vmul.f32 %v896, %v954
    %v956 = vsub.f32 1.0, %v955
    %v957 = vmul.f32 %v954, %v956
    %v958 = vadd.f32 %v954, %v957
    %vm959 = vweird.f32 %v896
    %vm960 = vweird.f32 %v954
    %vm961 = vmor %vm959, %vm960
    %v962 = vsel %vm961, %v954, %v958
    %v963 = vand.u32 2147483647, %v896
    %vm964 = vcmp.eq.f32.partialorder %v963, 8.507059e+37
    %v965 = vand.u32 %v896, 2147483648
    %v966 = vor.u32 1.1754944e-38, %v965
    %v967 = vsel %vm964, %v966, %v962
    %v968 = vmul.f32 %v932, %v967
    %v969 = vrcp.pop %v899
    %v970 = vmul.f32 %v899, %v969
    %v971 = vsub.f32 1.0, %v970
    %v972 = vmul.f32 %v969, %v971
    %v973 = vadd.f32 %v969, %v972
    %vm974 = vweird.f32 %v899
    %vm975 = vweird.f32 %v969
    %vm976 = vmor %vm974, %vm975
    %v977 = vsel %vm976, %v969, %v973
    %v978 = vand.u32 2147483647, %v899
    %vm979 = vcmp.eq.f32.partialorder %v978, 8.507059e+37
    %v980 = vand.u32 %v899, 2147483648
    %v981 = vor.u32 1.1754944e-38, %v980
    %v982 = vsel %vm979, %v981, %v977
    %v983 = vmul.f32 %v933, %v982
    %v984 = vrcp.pop %v902
    %v985 = vmul.f32 %v902, %v984
    %v986 = vsub.f32 1.0, %v985
    %v987 = vmul.f32 %v984, %v986
    %v988 = vadd.f32 %v984, %v987
    %vm989 = vweird.f32 %v902
    %vm990 = vweird.f32 %v984
    %vm991 = vmor %vm989, %vm990
    %v992 = vsel %vm991, %v984, %v988
    %v993 = vand.u32 2147483647, %v902
    %vm994 = vcmp.eq.f32.partialorder %v993, 8.507059e+37
    %v995 = vand.u32 %v902, 2147483648
    %v996 = vor.u32 1.1754944e-38, %v995
    %v997 = vsel %vm994, %v996, %v992
    %v998 = vmul.f32 %v934, %v997
    %v999 = vrcp.pop %v905
    %v1000 = vmul.f32 %v905, %v999
    %v1001 = vsub.f32 1.0, %v1000
    %v1002 = vmul.f32 %v999, %v1001
    %v1003 = vadd.f32 %v999, %v1002
    %vm1004 = vweird.f32 %v905
    %vm1005 = vweird.f32 %v999
    %vm1006 = vmor %vm1004, %vm1005
    %v1007 = vsel %vm1006, %v999, %v1003
    %v1008 = vand.u32 2147483647, %v905
    %vm1009 = vcmp.eq.f32.partialorder %v1008, 8.507059e+37
    %v1010 = vand.u32 %v905, 2147483648
    %v1011 = vor.u32 1.1754944e-38, %v1010
    %v1012 = vsel %vm1009, %v1011, %v1007
    %v1013 = vmul.f32 %v935, %v1012
    %v1014 = vrcp.pop %v908
    %v1015 = vmul.f32 %v908, %v1014
    %v1016 = vsub.f32 1.0, %v1015
    %v1017 = vmul.f32 %v1014, %v1016
    %v1018 = vadd.f32 %v1014, %v1017
    %vm1019 = vweird.f32 %v908
    %vm1020 = vweird.f32 %v1014
    %vm1021 = vmor %vm1019, %vm1020
    %v1022 = vsel %vm1021, %v1014, %v1018
    %v1023 = vand.u32 2147483647, %v908
    %vm1024 = vcmp.eq.f32.partialorder %v1023, 8.507059e+37
    %v1025 = vand.u32 %v908, 2147483648
    %v1026 = vor.u32 1.1754944e-38, %v1025
    %v1027 = vsel %vm1024, %v1026, %v1022
    %v1028 = vmul.f32 %v936, %v1027
    %v1029 = vrcp.pop %v911
    %v1030 = vmul.f32 %v911, %v1029
    %v1031 = vsub.f32 1.0, %v1030
    %v1032 = vmul.f32 %v1029, %v1031
    %v1033 = vadd.f32 %v1029, %v1032
    %vm1034 = vweird.f32 %v911
    %vm1035 = vweird.f32 %v1029
    %vm1036 = vmor %vm1034, %vm1035
    %v1037 = vsel %vm1036, %v1029, %v1033
    %v1038 = vand.u32 2147483647, %v911
    %vm1039 = vcmp.eq.f32.partialorder %v1038, 8.507059e+37
    %v1040 = vand.u32 %v911, 2147483648
    %v1041 = vor.u32 1.1754944e-38, %v1040
    %v1042 = vsel %vm1039, %v1041, %v1037
    %v1043 = vmul.f32 %v937, %v1042
    %v1044 = vrcp.pop %v914
    %v1045 = vmul.f32 %v914, %v1044
    %v1046 = vsub.f32 1.0, %v1045
    %v1047 = vmul.f32 %v1044, %v1046
    %v1048 = vadd.f32 %v1044, %v1047
    %vm1049 = vweird.f32 %v914
    %vm1050 = vweird.f32 %v1044
    %vm1051 = vmor %vm1049, %vm1050
    %v1052 = vsel %vm1051, %v1044, %v1048
    %v1053 = vand.u32 2147483647, %v914
    %vm1054 = vcmp.eq.f32.partialorder %v1053, 8.507059e+37
    %v1055 = vand.u32 %v914, 2147483648
    %v1056 = vor.u32 1.1754944e-38, %v1055
    %v1057 = vsel %vm1054, %v1056, %v1052
    %v1058 = vmul.f32 %v938, %v1057
    %v1059 = vmul.f32 %v876, %v953
    %v1060 = vmul.f32 %v878, %v968
    %v1061 = vmul.f32 %v880, %v983
    %v1062 = vmul.f32 %v882, %v998
    %v1063 = vmul.f32 %v884, %v1013
    %v1064 = vmul.f32 %v886, %v1028
    %v1065 = vmul.f32 %v888, %v1043
    %v1066 = vmul.f32 %v890, %v1058
    %1067 = vrot.lane.b32.xlu0 %v719, 112
    %v1068 = vpop.permute.xlu0 %1067
    %1069 = vrot.lane.b32.xlu0 %v722, 112
    %v1070 = vpop.permute.xlu0 %1069
    %1071 = vrot.lane.b32.xlu0 %v727, 112
    %v1072 = vpop.permute.xlu0 %1071
    %1073 = vrot.lane.b32.xlu0 %v729, 112
    %v1074 = vpop.permute.xlu0 %1073
    %1075 = vrot.lane.b32.xlu0 %v731, 112
    %v1076 = vpop.permute.xlu0 %1075
    %1077 = vrot.lane.b32.xlu0 %v733, 112
    %v1078 = vpop.permute.xlu0 %1077
    %1079 = vrot.lane.b32.xlu0 %v735, 112
    %v1080 = vpop.permute.xlu0 %1079
    %1081 = vrot.lane.b32.xlu0 %v737, 112
    %v1082 = vpop.permute.xlu0 %1081
    %v1092 = vsel %vm242, %v1059, 0
    %v1095 = vsel %vm242, %v1060, 0
    %v1098 = vsel %vm242, %v1061, 0
    %v1101 = vsel %vm242, %v1062, 0
    %v1104 = vsel %vm242, %v1063, 0
    %v1107 = vsel %vm242, %v1064, 0
    %v1110 = vsel %vm242, %v1065, 0
    %v1113 = vsel %vm242, %v1066, 0
    %1115 = vmatpush.msra.mxu0 0.0
    %1116 = vmatpush.msra.mxu0 0.0
    %1117 = vmatpush.msra.mxu0 0.0
    %1118 = vmatpush.msra.mxu0 0.0
    %1119 = vmatpush.msra.mxu0 0.0
    %1120 = vmatpush.msra.mxu0 0.0
    %1121 = vmatpush.msra.mxu0 0.0
    %1122 = vmatpush.msra.mxu0 0.0
    %1123 = vmatpush.msra.mxu0 %v1082
    %1124 = vmatpush.msra.mxu0 %v1080
    %1125 = vmatpush.msra.mxu0 %v1078
    %1126 = vmatpush.msra.mxu0 %v1076
    %1127 = vmatpush.msra.mxu0 %v1074
    %1128 = vmatpush.msra.mxu0 %v1072
    %1129 = vmatpush.msra.mxu0 %v1070
    %1130 = vmatpush.msra.mxu0 %v1068
    %1131 = vmatmul.f32.gmra.mxu0 %v1092
    %v1132 = vpop.f32.mrf.mxu0
    %v1133 = vadd.f32 0.0, %v1132
    %1134 = vmatmul.f32.gmra.mxu0 %v1095
    %v1135 = vpop.f32.mrf.mxu0
    %v1136 = vadd.f32 0.0, %v1135
    %1137 = vmatmul.f32.gmra.mxu0 %v1098
    %v1138 = vpop.f32.mrf.mxu0
    %v1139 = vadd.f32 0.0, %v1138
    %1140 = vmatmul.f32.gmra.mxu0 %v1101
    %v1141 = vpop.f32.mrf.mxu0
    %v1142 = vadd.f32 0.0, %v1141
    %1143 = vmatmul.f32.gmra.mxu0 %v1104
    %v1144 = vpop.f32.mrf.mxu0
    %v1145 = vadd.f32 0.0, %v1144
    %1146 = vmatmul.f32.gmra.mxu0 %v1107
    %v1147 = vpop.f32.mrf.mxu0
    %v1148 = vadd.f32 0.0, %v1147
    %1149 = vmatmul.f32.gmra.mxu0 %v1110
    %v1150 = vpop.f32.mrf.mxu0
    %v1151 = vadd.f32 0.0, %v1150
    %1152 = vmatmul.f32.gmra.mxu0 %v1113
    %v1153 = vpop.f32.mrf.mxu0
    %v1154 = vadd.f32 0.0, %v1153
    %1155 = vdwg.mxu0
    %v1157 = vsel %vm93, %v1139, 0
    %v1160 = vsel %vm93, %v1142, 0
    %1162 = vmatpush.msra.mxu0 0.0
    %1163 = vmatpush.msra.mxu0 0.0
    %1164 = vmatpush.msra.mxu0 0.0
    %1165 = vmatpush.msra.mxu0 0.0
    %1166 = vmatpush.msra.mxu0 0.0
    %1167 = vmatpush.msra.mxu0 0.0
    %1168 = vmatpush.msra.mxu0 0.0
    %1169 = vmatpush.msra.mxu0 0.0
    %1170 = vmatpush.msra.mxu0 0.0
    %1171 = vmatpush.msra.mxu0 0.0
    %1172 = vmatpush.msra.mxu0 0.0
    %1173 = vmatpush.msra.mxu0 0.0
    %1174 = vmatpush.msra.mxu0 0.0
    %1175 = vmatpush.msra.mxu0 0.0
    %1176 = vmatpush.msra.mxu0 0.0
    %1177 = vmatpush.msra.mxu0 %v83
    %1178 = vmatmul.f32.gmra.mxu0 %v1157
    %v1179 = vpop.f32.mrf.mxu0
    %v1180 = vadd.f32 0.0, %v1179
    %1181 = vmatmul.f32.gmra.mxu0 %v1160
    %v1182 = vpop.f32.mrf.mxu0
    %v1183 = vadd.f32 0.0, %v1182
    %1184 = vdwg.mxu0
    %v1186 = vsel %vm93, %v1133, 0
    %v1189 = vsel %vm93, %v1136, 0
    %1191 = vmatpush.msra.mxu0 0.0
    %1192 = vmatpush.msra.mxu0 0.0
    %1193 = vmatpush.msra.mxu0 0.0
    %1194 = vmatpush.msra.mxu0 0.0
    %1195 = vmatpush.msra.mxu0 0.0
    %1196 = vmatpush.msra.mxu0 0.0
    %1197 = vmatpush.msra.mxu0 0.0
    %1198 = vmatpush.msra.mxu0 0.0
    %1199 = vmatpush.msra.mxu0 0.0
    %1200 = vmatpush.msra.mxu0 0.0
    %1201 = vmatpush.msra.mxu0 0.0
    %1202 = vmatpush.msra.mxu0 0.0
    %1203 = vmatpush.msra.mxu0 0.0
    %1204 = vmatpush.msra.mxu0 0.0
    %1205 = vmatpush.msra.mxu0 0.0
    %1206 = vmatpush.msra.mxu0 %v82
    %1207 = vmatmul.f32.gmra.mxu0 %v1186
    %v1208 = vpop.f32.mrf.mxu0
    %v1209 = vadd.f32 %v1180, %v1208
    %1210 = vmatmul.f32.gmra.mxu0 %v1189
    %v1211 = vpop.f32.mrf.mxu0
    %v1212 = vadd.f32 %v1183, %v1211
    %1213 = vdwg.mxu0
    %v1215 = vsel %vm93, %v1145, 0
    %v1218 = vsel %vm93, %v1148, 0
    %1220 = vmatpush.msra.mxu0 0.0
    %1221 = vmatpush.msra.mxu0 0.0
    %1222 = vmatpush.msra.mxu0 0.0
    %1223 = vmatpush.msra.mxu0 0.0
    %1224 = vmatpush.msra.mxu0 0.0
    %1225 = vmatpush.msra.mxu0 0.0
    %1226 = vmatpush.msra.mxu0 0.0
    %1227 = vmatpush.msra.mxu0 0.0
    %1228 = vmatpush.msra.mxu0 0.0
    %1229 = vmatpush.msra.mxu0 0.0
    %1230 = vmatpush.msra.mxu0 0.0
    %1231 = vmatpush.msra.mxu0 0.0
    %1232 = vmatpush.msra.mxu0 0.0
    %1233 = vmatpush.msra.mxu0 0.0
    %1234 = vmatpush.msra.mxu0 0.0
    %1235 = vmatpush.msra.mxu0 %v84
    %1236 = vmatmul.f32.gmra.mxu0 %v1215
    %v1237 = vpop.f32.mrf.mxu0
    %v1238 = vadd.f32 0.0, %v1237
    %1239 = vmatmul.f32.gmra.mxu0 %v1218
    %v1240 = vpop.f32.mrf.mxu0
    %v1241 = vadd.f32 0.0, %v1240
    %1242 = vdwg.mxu0
    %v1243 = vadd.f32 %v1209, %v1238
    %v1244 = vadd.f32 %v1212, %v1241
    %v1246 = vsel %vm93, %v1151, 0
    %v1249 = vsel %vm93, %v1154, 0
    %1251 = vmatpush.msra.mxu0 0.0
    %1252 = vmatpush.msra.mxu0 0.0
    %1253 = vmatpush.msra.mxu0 0.0
    %1254 = vmatpush.msra.mxu0 0.0
    %1255 = vmatpush.msra.mxu0 0.0
    %1256 = vmatpush.msra.mxu0 0.0
    %1257 = vmatpush.msra.mxu0 0.0
    %1258 = vmatpush.msra.mxu0 0.0
    %1259 = vmatpush.msra.mxu0 0.0
    %1260 = vmatpush.msra.mxu0 0.0
    %1261 = vmatpush.msra.mxu0 0.0
    %1262 = vmatpush.msra.mxu0 0.0
    %1263 = vmatpush.msra.mxu0 0.0
    %1264 = vmatpush.msra.mxu0 0.0
    %1265 = vmatpush.msra.mxu0 0.0
    %1266 = vmatpush.msra.mxu0 %v85
    %1267 = vmatmul.f32.gmra.mxu0 %v1246
    %v1268 = vpop.f32.mrf.mxu0
    %v1269 = vadd.f32 0.0, %v1268
    %1270 = vmatmul.f32.gmra.mxu0 %v1249
    %v1271 = vpop.f32.mrf.mxu0
    %v1272 = vadd.f32 0.0, %v1271
    %1273 = vdwg.mxu0
    %v1274 = vadd.f32 %v1243, %v1269
    %v1275 = vadd.f32 %v1244, %v1272
    %1276 = vrot.lane.b32.xlu0 %v719, 32
    %v1277 = vpop.permute.xlu0 %1276
    %1278 = vrot.lane.b32.xlu0 %v722, 32
    %v1279 = vpop.permute.xlu0 %1278
    %v1282 = vadd.f32 %v1274, %v1277
    %v1283 = vadd.f32 %v1275, %v1279
    %v1284 = vmax.f32 %v1282, 0.0
    %v1285 = vmax.f32 %v1283, 0.0
    %v1286 = vld [vmem:[%s2] sm:$0xff]
    %v1287 = vld [vmem:[%s2 + $0x8] sm:$0xff]
    %vm1288 = vcmp.eq.s32.totalorder %v1286, 0
    %vm1289 = vcmp.eq.s32.totalorder %v1287, 0
    %v1290 = vsel %vm1288, 1, 0
    %v1291 = vsel %vm1289, 1, 0
    %1292 = vset.pattern.permute.xlu0 0
    %1293 = vperm.xlu0 %1292, %v1290
    %v1294 = vpop.permute.xlu0 %1293
    %1295 = vset.pattern.permute.xlu0 0
    %1296 = vperm.xlu0 %1295, %v1291
    %v1297 = vpop.permute.xlu0 %1296
    %vm1298 = vcmp.eq.s32.totalorder %v1294, 1
    %vm1299 = vcmp.eq.s32.totalorder %v1297, 1
    %v1300 = vsel %vm1298, %v1284, -1e+30
    %v1301 = vsel %vm1299, %v1285, -1e+30
    %v1302 = vsel %vm694, %v1300, -inf
    %v1303 = vsel %vm694, %v1301, -inf
    %v1304 = vmax.f32 %v1302, %v1303
    %v1305 = vrot.slane %v1304, 4
    %v1306 = vmax.f32 %v1304, %v1305
    %v1307 = vrot.slane %v1306, 2
    %v1308 = vmax.f32 %v1306, %v1307
    %v1309 = vrot.slane %v1308, 1
    %v1310 = vmax.f32 %v1308, %v1309
    %vm1311 = vcmp.eq.s32.totalorder %v68, 0
    %v1312 = vsel %vm1311, 1, 0
    %vm1313 = vcmp.eq.s32.totalorder %v1312, 1
    %v1314 = vsel %vm1313, %v1310, -1e+30
    %vm1315 = vcmp.eq.s32.totalorder %v1286, 1
    %vm1316 = vcmp.eq.s32.totalorder %v1287, 1
    %v1317 = vsel %vm1315, 1, 0
    %v1318 = vsel %vm1316, 1, 0
    %1319 = vset.pattern.permute.xlu0 0
    %1320 = vperm.xlu0 %1319, %v1317
    %v1321 = vpop.permute.xlu0 %1320
    %1322 = vset.pattern.permute.xlu0 0
    %1323 = vperm.xlu0 %1322, %v1318
    %v1324 = vpop.permute.xlu0 %1323
    %vm1325 = vcmp.eq.s32.totalorder %v1321, 1
    %vm1326 = vcmp.eq.s32.totalorder %v1324, 1
    %v1327 = vsel %vm1325, %v1284, -1e+30
    %v1328 = vsel %vm1326, %v1285, -1e+30
    %v1329 = vsel %vm694, %v1327, -inf
    %v1330 = vsel %vm694, %v1328, -inf
    %v1331 = vmax.f32 %v1329, %v1330
    %v1332 = vrot.slane %v1331, 4
    %v1333 = vmax.f32 %v1331, %v1332
    %v1334 = vrot.slane %v1333, 2
    %v1335 = vmax.f32 %v1333, %v1334
    %v1336 = vrot.slane %v1335, 1
    %v1337 = vmax.f32 %v1335, %v1336
    %vm1338 = vcmp.eq.s32.totalorder %v68, 1
    %v1339 = vsel %vm1338, 1, 0
    %vm1340 = vcmp.eq.s32.totalorder %v1339, 1
    %v1341 = vsel %vm1340, %v1337, %v1314
    %v1342 = vld [vmem:[%s7] sm:$0xff]
    %v1343 = vld [vmem:[%s7 + $0x8] sm:$0xff]
    %v1344 = vld [vmem:[%s7 + $0x10] sm:$0xff]
    %v1345 = vld [vmem:[%s7 + $0x18] sm:$0xff]
    %v1346 = vld [vmem:[%s7 + $0x20] sm:$0xff]
    %v1347 = vld [vmem:[%s7 + $0x28] sm:$0xff]
    %v1348 = vld [vmem:[%s7 + $0x30] sm:$0xff]
    %v1349 = vld [vmem:[%s7 + $0x38] sm:$0xff]
    %v1350 = vld [vmem:[%s7 + $0x40] sm:$0xff]
    %v1351 = vld [vmem:[%s7 + $0x48] sm:$0xff]
    %v1352 = vld [vmem:[%s7 + $0x50] sm:$0xff]
    %v1353 = vld [vmem:[%s7 + $0x58] sm:$0xff]
    %v1354 = vld [vmem:[%s7 + $0x60] sm:$0xff]
    %v1355 = vld [vmem:[%s7 + $0x68] sm:$0xff]
    %v1356 = vld [vmem:[%s7 + $0x70] sm:$0xff]
    %v1357 = vld [vmem:[%s7 + $0x78] sm:$0xff]
    %v1358 = vld [vmem:[%s8] sm:$0xf]
    %v1359 = vperm.slane %v1358, 0
    %v1361 = vsel %vm694, %v1341, 0
    %1363 = vmatpush.msra.mxu0 0.0
    %1364 = vmatpush.msra.mxu0 0.0
    %1365 = vmatpush.msra.mxu0 0.0
    %1366 = vmatpush.msra.mxu0 0.0
    %1367 = vmatpush.msra.mxu0 0.0
    %1368 = vmatpush.msra.mxu0 0.0
    %1369 = vmatpush.msra.mxu0 0.0
    %1370 = vmatpush.msra.mxu0 0.0
    %1371 = vmatpush.msra.mxu0 0.0
    %1372 = vmatpush.msra.mxu0 0.0
    %1373 = vmatpush.msra.mxu0 0.0
    %1374 = vmatpush.msra.mxu0 0.0
    %1375 = vmatpush.msra.mxu0 %v1345
    %1376 = vmatpush.msra.mxu0 %v1344
    %1377 = vmatpush.msra.mxu0 %v1343
    %1378 = vmatpush.msra.mxu0 %v1342
    %1379 = vmatmul.f32.gmra.mxu0 %v1361
    %v1380 = vpop.f32.mrf.mxu0
    %v1381 = vadd.f32 %v1359, %v1380
    %1382 = vdwg.mxu0
    %v1383 = vmax.f32 %v1381, 0.0
    %v1384 = vperm.slane %v1358, 1
    %v1386 = vsel %vm694, %v1383, 0
    %1388 = vmatpush.msra.mxu0 0.0
    %1389 = vmatpush.msra.mxu0 0.0
    %1390 = vmatpush.msra.mxu0 0.0
    %1391 = vmatpush.msra.mxu0 0.0
    %1392 = vmatpush.msra.mxu0 0.0
    %1393 = vmatpush.msra.mxu0 0.0
    %1394 = vmatpush.msra.mxu0 0.0
    %1395 = vmatpush.msra.mxu0 0.0
    %1396 = vmatpush.msra.mxu0 0.0
    %1397 = vmatpush.msra.mxu0 0.0
    %1398 = vmatpush.msra.mxu0 0.0
    %1399 = vmatpush.msra.mxu0 0.0
    %1400 = vmatpush.msra.mxu0 %v1349
    %1401 = vmatpush.msra.mxu0 %v1348
    %1402 = vmatpush.msra.mxu0 %v1347
    %1403 = vmatpush.msra.mxu0 %v1346
    %1404 = vmatmul.f32.gmra.mxu0 %v1386
    %v1405 = vpop.f32.mrf.mxu0
    %v1406 = vadd.f32 %v1384, %v1405
    %1407 = vdwg.mxu0
    %v1408 = vperm.slane %v1358, 2
    %v1410 = vsel %vm694, %v1406, 0
    %1412 = vmatpush.msra.mxu0 0.0
    %1413 = vmatpush.msra.mxu0 0.0
    %1414 = vmatpush.msra.mxu0 0.0
    %1415 = vmatpush.msra.mxu0 0.0
    %1416 = vmatpush.msra.mxu0 0.0
    %1417 = vmatpush.msra.mxu0 0.0
    %1418 = vmatpush.msra.mxu0 0.0
    %1419 = vmatpush.msra.mxu0 0.0
    %1420 = vmatpush.msra.mxu0 0.0
    %1421 = vmatpush.msra.mxu0 0.0
    %1422 = vmatpush.msra.mxu0 0.0
    %1423 = vmatpush.msra.mxu0 0.0
    %1424 = vmatpush.msra.mxu0 %v1353
    %1425 = vmatpush.msra.mxu0 %v1352
    %1426 = vmatpush.msra.mxu0 %v1351
    %1427 = vmatpush.msra.mxu0 %v1350
    %1428 = vmatmul.f32.gmra.mxu0 %v1410
    %v1429 = vpop.f32.mrf.mxu0
    %v1430 = vadd.f32 %v1408, %v1429
    %1431 = vdwg.mxu0
    %v1432 = vmax.f32 %v1430, 0.0
    %v1433 = vperm.slane %v1358, 3
    %v1435 = vsel %vm694, %v1432, 0
    %1437 = vmatpush.msra.mxu0 0.0
    %1438 = vmatpush.msra.mxu0 0.0
    %1439 = vmatpush.msra.mxu0 0.0
    %1440 = vmatpush.msra.mxu0 0.0
    %1441 = vmatpush.msra.mxu0 0.0
    %1442 = vmatpush.msra.mxu0 0.0
    %1443 = vmatpush.msra.mxu0 0.0
    %1444 = vmatpush.msra.mxu0 0.0
    %1445 = vmatpush.msra.mxu0 0.0
    %1446 = vmatpush.msra.mxu0 0.0
    %1447 = vmatpush.msra.mxu0 0.0
    %1448 = vmatpush.msra.mxu0 0.0
    %1449 = vmatpush.msra.mxu0 %v1357
    %1450 = vmatpush.msra.mxu0 %v1356
    %1451 = vmatpush.msra.mxu0 %v1355
    %1452 = vmatpush.msra.mxu0 %v1354
    %1453 = vmatmul.f32.gmra.mxu0 %v1435
    %v1454 = vpop.f32.mrf.mxu0
    %v1455 = vadd.f32 %v1433, %v1454
    %1456 = vdwg.mxu0
    %vm1457 = vcmask 254976
    %v1458 = vsel %vm1457, %v1455, -inf
    %1459 = vmax.xlane.f32.xlu0 %v1458
    %v1460 = vpop.xlane.xlu0 %1459
    %v1461 = vsub.f32 %v1455, %v1460
    %v1462 = vmul.f32 %v1461, 1.442695
    %v1463 = vpow.pop %v1462
    %v1464 = vsel %vm1457, %v1463, 0.0
    %1465 = vadd.xlane.f32.xlu0 %v1464
    %v1466 = vpop.xlane.xlu0 %1465
    %v1467 = vlog2.pop %v1466
    %v1468 = vmul.f32 %v1467, 0.6931472
    %v1469 = vsub.f32 %v1461, %v1468
    %1470 = vst.msk [vmem:[#allocation2] sm:$0x3] %vm1457, %v1469
    // Predicated region
    $region38: #{graph_transformer_classifier.1} parent=1 // pred_check
      _
    $region39: #{graph_transformer_classifier.1} parent=1 // pred_check_branch
      %1472 = sbr.rel (0) target = $region41
    $region40: #{graph_transformer_classifier.1} parent=1 // pred_region
      %1474 = vsyncadd [#allocation3], 0
      %s1476 = sshll.u32 [#allocation2], 4
      %s1477 = int_to_ptr.vmem [resolvable:$true] %s1476
      %s1478 = sshll.u32 %s9, 4
      %s1479 = int_to_ptr.hbm [resolvable:$true] %s1478
      %1481 = dma.vmem_to_hbm [thread:$0]  %s1477, 32, %s1479, [#allocation3]
    $region41: #{graph_transformer_classifier.1} parent=1 // pred_fallthru
      _
    // Predicated region
    $region42: #{graph_transformer_classifier.1} parent=1 // pred_check
      _
    $region43: #{graph_transformer_classifier.1} parent=1 // pred_check_branch
      %1483 = sbr.rel (0) target = $region45
    $region44: #{graph_transformer_classifier.1} parent=1 // pred_region
      %1485 = dma.done [#allocation3], 32
    $region45: #{graph_transformer_classifier.1} parent=1 // pred_fallthru
      _
    %1486 = vsyncpa [#allocation3], 1

</llo_original>
